<compile_context>
chip_gen: v7x
topology: tpu7x:2x2x1
jax: 0.10.0
libtpu: 0.0.40
codegen_flags: <defaults>
</compile_context>

<pallas_src>
import functools

import jax
import jax.numpy as jnp
from jax.experimental import pallas as pl
from jax.experimental.pallas import tpu as pltpu


def _cdiv(a, b):
    return (a + b - 1) // b


def _round_up(x, m):
    return _cdiv(x, m) * m


def _conv_taps_kernel(xm_ref, xh_ref, w_ref, b_ref, o_ref, slab_ref, *,
                      K, Wp, tile_cols, negative_slope, apply_act):
    # xm_ref:   (1, C_in, tile_cols)         main flat-spatial columns of this tile
    # xh_ref:   (1, C_in, halo_blk)          halo columns (continuation of the tile)
    # w_ref:    (K*K, C_out, C_in)           per-tap weights
    # b_ref:    (C_out, 1)                   bias
    # o_ref:    (1, C_out, tile_cols)        output tile (lane-dense)
    # slab_ref: (C_in, tile_cols + halo_blk) VMEM scratch (tile + halo)
    c_out = w_ref.shape[1]

    # Assemble the contiguous slab (both writes are 128-lane aligned).
    slab_ref[:, :tile_cols] = xm_ref[0]
    slab_ref[:, tile_cols:] = xh_ref[0]

    # Accumulator starts as the broadcast bias (fuses the bias add).
    acc = jnp.broadcast_to(b_ref[...], (c_out, tile_cols)).astype(jnp.float32)

    # K*K shifted matmuls accumulated in f32: tap (kh, kw) is a static lane
    # offset of kh*Wp + kw into the slab.
    for kh in range(K):
        for kw in range(K):
            off = kh * Wp + kw
            lhs = w_ref[kh * K + kw]                    # (C_out, C_in)
            rhs = slab_ref[:, off:off + tile_cols]      # (C_in, tile_cols)
            acc = acc + jnp.dot(lhs, rhs, preferred_element_type=jnp.float32)

    if apply_act:
        acc = jnp.where(acc >= 0, acc, negative_slope * acc)
    o_ref[0] = acc.astype(o_ref.dtype)


def conv_layer_forward(x, weight, bias, *, stride, is_last=False,
                       tile_cols=2048, vmem_budget_bytes=16 * 1024 * 1024):
    """Pallas implementation of ConvLayer.forward (NCHW in, NCHW out).

    x:      (N, C_in, H, W)      float32
    weight: (C_out, C_in, K, K)  float32
    bias:   (C_out,)             float32
    """
    N, C_in, H, W = x.shape
    C_out, _, K, _ = weight.shape
    pad = K // 2
    s = stride

    # --- glue: reflection pad (matches nn.ReflectionPad2d), stays NCHW ---
    xp = jnp.pad(x, ((0, 0), (0, 0), (pad, pad), (pad, pad)), mode="reflect")
    Hp, Wp = H + 2 * pad, W + 2 * pad
    H_out = (Hp - K) // s + 1
    W_out = (Wp - K) // s + 1

    # Flatten spatial dims (layout-free reshape): xf[n, c, i*Wp + j] = xp[n, c, i, j]
    P_img = Hp * Wp
    xf = xp.reshape(N, C_in, P_img)

    # Max flat offset of any kernel tap relative to an output position.
    halo = (K - 1) * Wp + (K - 1)
    halo_blk = 128 * max(1, _cdiv(halo, 128))           # lane-aligned halo block

    # Tile along the flat-spatial (lane) dim; multiple of halo_blk (hence 128).
    tc = _round_up(min(tile_cols, P_img), halo_blk)

    def _vmem_bytes(t):
        itemsize = 4
        return itemsize * (2 * C_in * t             # double-buffered main input
                           + 2 * C_in * halo_blk    # double-buffered halo input
                           + 2 * C_out * t          # double-buffered output
                           + C_in * (t + halo_blk)  # slab scratch
                           + 2 * K * K * C_out * C_in  # weights
                           + 2 * C_out)             # bias

    while tc > halo_blk and _vmem_bytes(tc) > vmem_budget_bytes:
        tc -= halo_blk

    n_t = _cdiv(P_img, tc)
    ratio = tc // halo_blk
    L_in = n_t * tc + halo_blk

    # Small tail pad (zeros) so every tile + halo block is fully in bounds.
    xf = jnp.pad(xf, ((0, 0), (0, 0), (0, L_in - P_img)))

    # Per-tap weights: w_taps[kh*K + kw] = weight[:, :, kh, kw]  -> (C_out, C_in)
    w_taps = weight.transpose(2, 3, 0, 1).reshape(K * K, C_out, C_in)
    b2 = bias.reshape(C_out, 1)

    kernel = functools.partial(
        _conv_taps_kernel, K=K, Wp=Wp, tile_cols=tc,
        negative_slope=0.1, apply_act=(not is_last))

    flops = 2 * N * n_t * tc * K * K * C_in * C_out
    bytes_accessed = 4 * (N * C_in * L_in + K * K * C_in * C_out + C_out
                          + N * C_out * n_t * tc)
    vmem_limit = min(100 * 1024 * 1024,
                     max(_vmem_bytes(tc) + (4 << 20), 16 << 20))

    out = pl.pallas_call(
        kernel,
        out_shape=jax.ShapeDtypeStruct((N, C_out, n_t * tc), x.dtype),
        grid_spec=pltpu.PrefetchScalarGridSpec(
            num_scalar_prefetch=0,
            grid=(N, n_t),
            in_specs=[
                # main tile columns
                pl.BlockSpec((1, C_in, tc), lambda n, t: (n, 0, t)),
                # halo columns = the 128-aligned block right after this tile
                pl.BlockSpec((1, C_in, halo_blk),
                             lambda n, t: (n, 0, (t + 1) * ratio)),
                # constant per-tap weights and bias (constant index_map -> no re-DMA)
                pl.BlockSpec((K * K, C_out, C_in), lambda n, t: (0, 0, 0)),
                pl.BlockSpec((C_out, 1), lambda n, t: (0, 0)),
            ],
            out_specs=pl.BlockSpec((1, C_out, tc), lambda n, t: (n, 0, t)),
            scratch_shapes=[pltpu.VMEM((C_in, tc + halo_blk), x.dtype)],
        ),
        compiler_params=pltpu.CompilerParams(
            dimension_semantics=("parallel", "parallel"),
            vmem_limit_bytes=vmem_limit),
        cost_estimate=pl.CostEstimate(
            flops=flops, transcendentals=0, bytes_accessed=bytes_accessed),
    )(xf, xf, w_taps, b2)

    # Un-flatten, drop overcompute, subsample for stride.  Already NCHW.
    out = out[:, :, :P_img].reshape(N, C_out, Hp, Wp)
    out = out[:, :, :(H_out - 1) * s + 1:s, :(W_out - 1) * s + 1:s]
    return out


def _reference(x, weight, bias, *, stride, is_last):
    pad = weight.shape[-1] // 2
    xp = jnp.pad(x, ((0, 0), (0, 0), (pad, pad), (pad, pad)), mode="reflect")
    out = jax.lax.conv_general_dilated(
        xp, weight, window_strides=(stride, stride), padding="VALID",
        dimension_numbers=("NCHW", "OIHW", "NCHW"))
    out = out + bias.reshape(1, -1, 1, 1)
    if not is_last:
        out = jnp.where(out >= 0, out, 0.1 * out)
    return out


if __name__ == "__main__":
    key = jax.random.PRNGKey(0)
    k_x, k_w, k_b = jax.random.split(key, 3)

    # small shapes: batch=2, in_channels=4, out_channels=8, spatial=16
    N, C_in, C_out, H, W = 2, 4, 8, 16, 16
    kernel_size, stride, is_last = 3, 1, False

    x = jax.random.normal(k_x, (N, C_in, H, W), dtype=jnp.float32)
    # deterministic param init (uniform, PyTorch-like fan-in scale)
    fan_in = C_in * kernel_size * kernel_size
    bound = 1.0 / (fan_in ** 0.5)
    weight = jax.random.uniform(
        k_w, (C_out, C_in, kernel_size, kernel_size),
        minval=-bound, maxval=bound, dtype=jnp.float32)
    bias = jax.random.uniform(
        k_b, (C_out,), minval=-bound, maxval=bound, dtype=jnp.float32)

    out = conv_layer_forward(x, weight, bias, stride=stride, is_last=is_last)
    out = jax.block_until_ready(out)

    ref = _reference(x, weight, bias, stride=stride, is_last=is_last)
    assert out.shape == ref.shape, (out.shape, ref.shape)
    assert jnp.allclose(out, ref, atol=1e-4, rtol=1e-4), "mismatch vs reference"

    print("KERNEL_OK")
</pallas_src>

<mosaic_0001>
module attributes {stable_mosaic.version = 11 : i64} {
  func.func @_conv_taps_kernel(%arg0: i32, %arg1: i32, %arg2: memref<1x4x384xf32, #tpu.memory_space<vmem>>, %arg3: memref<1x4x128xf32, #tpu.memory_space<vmem>>, %arg4: memref<9x8x4xf32, #tpu.memory_space<vmem>>, %arg5: memref<8x1xf32, #tpu.memory_space<vmem>>, %arg6: memref<1x8x384xf32, #tpu.memory_space<vmem>>, %arg7: memref<4x512xf32, #tpu.memory_space<vmem>>) attributes {dimension_semantics = [#tpu.dimension_semantics<parallel>, #tpu.dimension_semantics<parallel>], iteration_bounds = array<i64: 2, 1>, scalar_prefetch = 0 : i64, scratch_operands = 1 : i64, tpu.core_type = #tpu.core_type<tc>, window_params = [{transform_indices = @transform_0, window_bounds = array<i64: 1, 4, 384>}, {transform_indices = @transform_1, window_bounds = array<i64: 1, 4, 128>}, {pipeline_mode = #tpu.pipeline_mode<synchronous>, transform_indices = @transform_2, window_bounds = array<i64: 9, 8, 4>}, {pipeline_mode = #tpu.pipeline_mode<synchronous>, transform_indices = @transform_3, window_bounds = array<i64: 8, 1>}, {transform_indices = @transform_4, window_bounds = array<i64: 1, 8, 384>}]} {
    %c0 = arith.constant 0 : index
    %c0_0 = arith.constant 0 : index
    %c0_1 = arith.constant 0 : index
    %0 = vector.load %arg2[%c0, %c0_0, %c0_1] : memref<1x4x384xf32, #tpu.memory_space<vmem>>, vector<1x4x384xf32>
    %1 = vector.shape_cast %0 : vector<1x4x384xf32> to vector<4x384xf32>
    %c0_2 = arith.constant 0 : index
    %c0_3 = arith.constant 0 : index
    %2 = vector.load %arg7[%c0_2, %c0_3] : memref<4x512xf32, #tpu.memory_space<vmem>>, vector<4x384xf32>
    tpu.vector_store %arg7[%c0_2, %c0_3], %1 {strides = array<i32>} : memref<4x512xf32, #tpu.memory_space<vmem>>, vector<4x384xf32>,
    %c0_4 = arith.constant 0 : index
    %c0_5 = arith.constant 0 : index
    %c0_6 = arith.constant 0 : index
    %3 = vector.load %arg3[%c0_4, %c0_5, %c0_6] : memref<1x4x128xf32, #tpu.memory_space<vmem>>, vector<1x4x128xf32>
    %4 = vector.shape_cast %3 : vector<1x4x128xf32> to vector<4x128xf32>
    %c0_7 = arith.constant 0 : index
    %c384 = arith.constant 384 : index
    %5 = vector.load %arg7[%c0_7, %c384] : memref<4x512xf32, #tpu.memory_space<vmem>>, vector<4x128xf32>
    tpu.vector_store %arg7[%c0_7, %c384], %4 {strides = array<i32>} : memref<4x512xf32, #tpu.memory_space<vmem>>, vector<4x128xf32>,
    %c0_8 = arith.constant 0 : index
    %c0_9 = arith.constant 0 : index
    %6 = vector.load %arg5[%c0_8, %c0_9] : memref<8x1xf32, #tpu.memory_space<vmem>>, vector<8x1xf32>
    %7 = vector.shape_cast %6 : vector<8x1xf32> to vector<8x1xf32>
    %8 = vector.broadcast %7 : vector<8x1xf32> to vector<8x384xf32>
    %c0_10 = arith.constant 0 : index
    %c0_11 = arith.constant 0 : index
    %c0_12 = arith.constant 0 : index
    %9 = vector.load %arg4[%c0_10, %c0_11, %c0_12] : memref<9x8x4xf32, #tpu.memory_space<vmem>>, vector<1x8x4xf32>
    %10 = vector.shape_cast %9 : vector<1x8x4xf32> to vector<8x4xf32>
    %c0_13 = arith.constant 0 : index
    %c0_14 = arith.constant 0 : index
    %11 = vector.load %arg7[%c0_13, %c0_14] : memref<4x512xf32, #tpu.memory_space<vmem>>, vector<4x384xf32>
    %cst = arith.constant dense<0.000000e+00> : vector<8x384xf32>
    %12 = tpu.matmul %10, %11, %cst {dimension_numbers = #tpu.dot_dimension_numbers<[1], [0], [0], [1], [0, 0, 1, 1], [], []>} : vector<8x4xf32>, vector<4x384xf32>, vector<8x384xf32> -> vector<8x384xf32>
    %13 = arith.addf %8, %12 : vector<8x384xf32>
    %c1 = arith.constant 1 : index
    %c0_15 = arith.constant 0 : index
    %c0_16 = arith.constant 0 : index
    %14 = vector.load %arg4[%c1, %c0_15, %c0_16] : memref<9x8x4xf32, #tpu.memory_space<vmem>>, vector<1x8x4xf32>
    %15 = vector.shape_cast %14 : vector<1x8x4xf32> to vector<8x4xf32>
    %c0_17 = arith.constant 0 : index
    %c1_18 = arith.constant 1 : index
    %16 = vector.load %arg7[%c0_17, %c1_18] : memref<4x512xf32, #tpu.memory_space<vmem>>, vector<4x384xf32>
    %cst_19 = arith.constant dense<0.000000e+00> : vector<8x384xf32>
    %17 = tpu.matmul %15, %16, %cst_19 {dimension_numbers = #tpu.dot_dimension_numbers<[1], [0], [0], [1], [0, 0, 1, 1], [], []>} : vector<8x4xf32>, vector<4x384xf32>, vector<8x384xf32> -> vector<8x384xf32>
    %18 = arith.addf %13, %17 : vector<8x384xf32>
    %c2 = arith.constant 2 : index
    %c0_20 = arith.constant 0 : index
    %c0_21 = arith.constant 0 : index
    %19 = vector.load %arg4[%c2, %c0_20, %c0_21] : memref<9x8x4xf32, #tpu.memory_space<vmem>>, vector<1x8x4xf32>
    %20 = vector.shape_cast %19 : vector<1x8x4xf32> to vector<8x4xf32>
    %c0_22 = arith.constant 0 : index
    %c2_23 = arith.constant 2 : index
    %21 = vector.load %arg7[%c0_22, %c2_23] : memref<4x512xf32, #tpu.memory_space<vmem>>, vector<4x384xf32>
    %cst_24 = arith.constant dense<0.000000e+00> : vector<8x384xf32>
    %22 = tpu.matmul %20, %21, %cst_24 {dimension_numbers = #tpu.dot_dimension_numbers<[1], [0], [0], [1], [0, 0, 1, 1], [], []>} : vector<8x4xf32>, vector<4x384xf32>, vector<8x384xf32> -> vector<8x384xf32>
    %23 = arith.addf %18, %22 : vector<8x384xf32>
    %c3 = arith.constant 3 : index
    %c0_25 = arith.constant 0 : index
    %c0_26 = arith.constant 0 : index
    %24 = vector.load %arg4[%c3, %c0_25, %c0_26] : memref<9x8x4xf32, #tpu.memory_space<vmem>>, vector<1x8x4xf32>
    %25 = vector.shape_cast %24 : vector<1x8x4xf32> to vector<8x4xf32>
    %c0_27 = arith.constant 0 : index
    %c18 = arith.constant 18 : index
    %26 = vector.load %arg7[%c0_27, %c18] : memref<4x512xf32, #tpu.memory_space<vmem>>, vector<4x384xf32>
    %cst_28 = arith.constant dense<0.000000e+00> : vector<8x384xf32>
    %27 = tpu.matmul %25, %26, %cst_28 {dimension_numbers = #tpu.dot_dimension_numbers<[1], [0], [0], [1], [0, 0, 1, 1], [], []>} : vector<8x4xf32>, vector<4x384xf32>, vector<8x384xf32> -> vector<8x384xf32>
    %28 = arith.addf %23, %27 : vector<8x384xf32>
    %c4 = arith.constant 4 : index
    %c0_29 = arith.constant 0 : index
    %c0_30 = arith.constant 0 : index
    %29 = vector.load %arg4[%c4, %c0_29, %c0_30] : memref<9x8x4xf32, #tpu.memory_space<vmem>>, vector<1x8x4xf32>
    %30 = vector.shape_cast %29 : vector<1x8x4xf32> to vector<8x4xf32>
    %c0_31 = arith.constant 0 : index
    %c19 = arith.constant 19 : index
    %31 = vector.load %arg7[%c0_31, %c19] : memref<4x512xf32, #tpu.memory_space<vmem>>, vector<4x384xf32>
    %cst_32 = arith.constant dense<0.000000e+00> : vector<8x384xf32>
    %32 = tpu.matmul %30, %31, %cst_32 {dimension_numbers = #tpu.dot_dimension_numbers<[1], [0], [0], [1], [0, 0, 1, 1], [], []>} : vector<8x4xf32>, vector<4x384xf32>, vector<8x384xf32> -> vector<8x384xf32>
    %33 = arith.addf %28, %32 : vector<8x384xf32>
    %c5 = arith.constant 5 : index
    %c0_33 = arith.constant 0 : index
    %c0_34 = arith.constant 0 : index
    %34 = vector.load %arg4[%c5, %c0_33, %c0_34] : memref<9x8x4xf32, #tpu.memory_space<vmem>>, vector<1x8x4xf32>
    %35 = vector.shape_cast %34 : vector<1x8x4xf32> to vector<8x4xf32>
    %c0_35 = arith.constant 0 : index
    %c20 = arith.constant 20 : index
    %36 = vector.load %arg7[%c0_35, %c20] : memref<4x512xf32, #tpu.memory_space<vmem>>, vector<4x384xf32>
    %cst_36 = arith.constant dense<0.000000e+00> : vector<8x384xf32>
    %37 = tpu.matmul %35, %36, %cst_36 {dimension_numbers = #tpu.dot_dimension_numbers<[1], [0], [0], [1], [0, 0, 1, 1], [], []>} : vector<8x4xf32>, vector<4x384xf32>, vector<8x384xf32> -> vector<8x384xf32>
    %38 = arith.addf %33, %37 : vector<8x384xf32>
    %c6 = arith.constant 6 : index
    %c0_37 = arith.constant 0 : index
    %c0_38 = arith.constant 0 : index
    %39 = vector.load %arg4[%c6, %c0_37, %c0_38] : memref<9x8x4xf32, #tpu.memory_space<vmem>>, vector<1x8x4xf32>
    %40 = vector.shape_cast %39 : vector<1x8x4xf32> to vector<8x4xf32>
    %c0_39 = arith.constant 0 : index
    %c36 = arith.constant 36 : index
    %41 = vector.load %arg7[%c0_39, %c36] : memref<4x512xf32, #tpu.memory_space<vmem>>, vector<4x384xf32>
    %cst_40 = arith.constant dense<0.000000e+00> : vector<8x384xf32>
    %42 = tpu.matmul %40, %41, %cst_40 {dimension_numbers = #tpu.dot_dimension_numbers<[1], [0], [0], [1], [0, 0, 1, 1], [], []>} : vector<8x4xf32>, vector<4x384xf32>, vector<8x384xf32> -> vector<8x384xf32>
    %43 = arith.addf %38, %42 : vector<8x384xf32>
    %c7 = arith.constant 7 : index
    %c0_41 = arith.constant 0 : index
    %c0_42 = arith.constant 0 : index
    %44 = vector.load %arg4[%c7, %c0_41, %c0_42] : memref<9x8x4xf32, #tpu.memory_space<vmem>>, vector<1x8x4xf32>
    %45 = vector.shape_cast %44 : vector<1x8x4xf32> to vector<8x4xf32>
    %c0_43 = arith.constant 0 : index
    %c37 = arith.constant 37 : index
    %46 = vector.load %arg7[%c0_43, %c37] : memref<4x512xf32, #tpu.memory_space<vmem>>, vector<4x384xf32>
    %cst_44 = arith.constant dense<0.000000e+00> : vector<8x384xf32>
    %47 = tpu.matmul %45, %46, %cst_44 {dimension_numbers = #tpu.dot_dimension_numbers<[1], [0], [0], [1], [0, 0, 1, 1], [], []>} : vector<8x4xf32>, vector<4x384xf32>, vector<8x384xf32> -> vector<8x384xf32>
    %48 = arith.addf %43, %47 : vector<8x384xf32>
    %c8 = arith.constant 8 : index
    %c0_45 = arith.constant 0 : index
    %c0_46 = arith.constant 0 : index
    %49 = vector.load %arg4[%c8, %c0_45, %c0_46] : memref<9x8x4xf32, #tpu.memory_space<vmem>>, vector<1x8x4xf32>
    %50 = vector.shape_cast %49 : vector<1x8x4xf32> to vector<8x4xf32>
    %c0_47 = arith.constant 0 : index
    %c38 = arith.constant 38 : index
    %51 = vector.load %arg7[%c0_47, %c38] : memref<4x512xf32, #tpu.memory_space<vmem>>, vector<4x384xf32>
    %cst_48 = arith.constant dense<0.000000e+00> : vector<8x384xf32>
    %52 = tpu.matmul %50, %51, %cst_48 {dimension_numbers = #tpu.dot_dimension_numbers<[1], [0], [0], [1], [0, 0, 1, 1], [], []>} : vector<8x4xf32>, vector<4x384xf32>, vector<8x384xf32> -> vector<8x384xf32>
    %53 = arith.addf %48, %52 : vector<8x384xf32>
    %cst_49 = arith.constant 0.000000e+00 : f32
    %54 = vector.broadcast %cst_49 : f32 to vector<8x384xf32>
    %55 = arith.cmpf oge, %53, %54 : vector<8x384xf32>
    %cst_50 = arith.constant 1.000000e-01 : f32
    %56 = vector.broadcast %cst_50 : f32 to vector<8x384xf32>
    %57 = arith.mulf %56, %53 : vector<8x384xf32>
    %58 = arith.select %55, %53, %57 : vector<8x384xi1>, vector<8x384xf32>
    %c0_51 = arith.constant 0 : index
    %c0_52 = arith.constant 0 : index
    %c0_53 = arith.constant 0 : index
    %59 = vector.load %arg6[%c0_51, %c0_52, %c0_53] : memref<1x8x384xf32, #tpu.memory_space<vmem>>, vector<1x8x384xf32>
    %60 = vector.shape_cast %59 : vector<1x8x384xf32> to vector<8x384xf32>
    %61 = vector.shape_cast %58 : vector<8x384xf32> to vector<1x8x384xf32>
    tpu.vector_store %arg6[%c0_51, %c0_52, %c0_53], %61 {strides = array<i32>} : memref<1x8x384xf32, #tpu.memory_space<vmem>>, vector<1x8x384xf32>,
    return
  }
  func.func @transform_0(%arg0: i32, %arg1: i32) -> (i32, i32, i32) {
    %c0_i32 = arith.constant 0 : i32
    %c0_i32_0 = arith.constant 0 : i32
    return %arg0, %c0_i32, %arg1 : i32, i32, i32
  }
  func.func @transform_1(%arg0: i32, %arg1: i32) -> (i32, i32, i32) {
    %c1_i32 = arith.constant 1 : i32
    %0 = arith.addi %arg1, %c1_i32 : i32
    %c3_i32 = arith.constant 3 : i32
    %1 = arith.muli %0, %c3_i32 : i32
    %c0_i32 = arith.constant 0 : i32
    %c0_i32_0 = arith.constant 0 : i32
    return %arg0, %c0_i32, %1 : i32, i32, i32
  }
  func.func @transform_2(%arg0: i32, %arg1: i32) -> (i32, i32, i32) {
    %c0_i32 = arith.constant 0 : i32
    %c0_i32_0 = arith.constant 0 : i32
    %c0_i32_1 = arith.constant 0 : i32
    %c0_i32_2 = arith.constant 0 : i32
    return %c0_i32, %c0_i32_0, %c0_i32_1 : i32, i32, i32
  }
  func.func @transform_3(%arg0: i32, %arg1: i32) -> (i32, i32) {
    %c0_i32 = arith.constant 0 : i32
    %c0_i32_0 = arith.constant 0 : i32
    %c0_i32_1 = arith.constant 0 : i32
    return %c0_i32, %c0_i32_0 : i32, i32
  }
  func.func @transform_4(%arg0: i32, %arg1: i32) -> (i32, i32, i32) {
    %c0_i32 = arith.constant 0 : i32
    %c0_i32_0 = arith.constant 0 : i32
    return %arg0, %c0_i32, %arg1 : i32, i32, i32
  }
}

</mosaic_0001>

<llo_original>
// kernel: tpu_custom_call.1
$region0: #{tpu_custom_call.1}
  #allocation0 [shape = 'u32[]', space=smem, size = 0x4, offset = 0x4, fixed_abs, tag = 'smem constant byte address 0x4 - core index']
  #allocation1 [shape = 'u32[144,128]{1,0:T(1,128)}', space=vmem, size = 0x12000, scoped, tag = 'internal scratch']
  #allocation2 [shape = 'f32[4,512]{1,0:T(4,128)}', space=vmem, size = 0x2000, scoped, tag = 'scratch operand']
  %s0 = inlined_call_operand.vmem [shape: f32[2,4,512], index: 0, kind: input, shape index: {}]
  %s1 = inlined_call_operand.vmem [shape: f32[2,4,512], index: 1, kind: input, shape index: {}]
  %s2 = inlined_call_operand.vmem [shape: f32[9,8,4], index: 2, kind: input, shape index: {}]
  %s3 = inlined_call_operand.vmem [shape: f32[8,1], index: 3, kind: input, shape index: {}]
  %s4 = inlined_call_operand.hbm [shape: f32[2,8,384], index: 4, kind: output, shape index: {}]
  %s5 = sld [smem:[#allocation0]]
  $region49: #{tpu_custom_call.1} parent=0
    _
  %s7 = ssub.s32 1, %s5
  %s8 = scalar_select 0, %s7, %s5
  $region1: #{tpu_custom_call.1} parent=0
    #allocation3 [shape = 'u8[24576]{0}', space=vmem, size = 0x6000, scoped, tag = 'output window, operand 0']
    #allocation4 [shape = 's32[2]{0}', space=sflag, size = 0x8, scoped, tag = 'scoped memory for tpu_custom_call.1']
    %9 = vsyncpa [#allocation4], 0
    %s10 = scalar_lea.sflag [#allocation4], 1
    %11 = vsyncpa %s10, 0
    loop: start=0, step=1, limit=4
    $region2: #{tpu_custom_call.1} parent=1 // loop_pre_header
      _
    $region3: #{tpu_custom_call.1} parent=1 // loop_header
      %s13 = sphi 0, %s17
      %p14 = scmp.ge.s32.totalorder %s13, 4
      %s20 = sphi 0, %s32
      %s21 = sphi 0, %s28
      %s22 = sphi 0, %s20
      %s23 = sphi 0, %s21
      %s24 = sphi 0, %s22
      %s25 = sphi 0, %s23
      %s37 = sphi 0, %s39
      %s40 = sphi 0, %s37
      %s41 = sphi 0, %s40
      %s57 = sphi 0, %s41
      %s69 = sphi 0, %s71
      %s72 = sphi 0, %s69
      %s73 = sphi 0, %s72
      %s89 = sphi 0, %s73
      %s93 = sphi 0, %s93
      %s95 = sphi 0, %s93
      %s96 = sphi 0, %s95
      %s110 = sphi 0, %s96
      %s114 = sphi 0, %s114
      %s116 = sphi 0, %s114
      %s117 = sphi 0, %s116
      %s131 = sphi 0, %s117
      %s139 = sphi 0, %s141
      %s142 = sphi 0, %s139
      %s143 = sphi 0, %s142
      %s159 = sphi 0, %s143
    $region4: #{tpu_custom_call.1} parent=1 // loop_header_branch
      %16 = sbr.rel (%p14) target = $region8
    $region5: #{tpu_custom_call.1} parent=1 // loop_body
      %s18 = ssub.s32 %s13, 1
      %s19 = ssub.s32 %s13, 2
      %s26 = sadd.s32 1, %s21
      %p27 = scmp.ge.s32.totalorder %s26, 1
      %s28 = scalar_select %p27, 0, %s26
      %s29 = sadd.s32 1, %s20
      %s30 = scalar_select %p27, %s29, %s20
      %p31 = scmp.ge.s32.totalorder %s30, 2
      %s32 = scalar_select %p31, 0, %s30
      %s33 = ssub.s32 %s20, %s32
      %s34 = ssub.s32 %s21, %s28
      %s35 = sor.u32 %s33, %s34
      %p36 = scmp.eq.s32.totalorder %s35, 0
      %s38 = sadd.s32 %s37, 1
      %s39 = scalar_select %p36, %s37, %s38
      %p42 = pneg %p36
      %p43 = scmp.eq.s32.totalorder %s13, 1
      %p44 = por %p42, %p43
      %p45 = scmp.ne.s32.totalorder %s37, %s40
      %p46 = scmp.eq.s32.totalorder %s13, 0
      %p47 = por %p45, %p46
      %p48 = scmp.ne.s32.totalorder %s37, %s40
      %p49 = scmp.eq.s32.totalorder %s18, 1
      %p50 = por %p48, %p49
      %p51 = scmp.ne.s32.totalorder %s40, %s41
      %p52 = scmp.eq.s32.totalorder %s18, 0
      %p53 = por %p51, %p52
      %p54 = scmp.ne.s32.totalorder %s40, %s41
      %p55 = scmp.eq.s32.totalorder %s19, 1
      %p56 = por %p54, %p55
      %p58 = scmp.ne.s32.totalorder %s41, %s57
      %p59 = scmp.eq.s32.totalorder %s19, 0
      %p60 = por %p58, %p59
      %s61 = sadd.s32 %s21, 1
      %s62 = smul.u32 %s61, 3
      %s63 = sadd.s32 %s28, 1
      %s64 = smul.u32 %s63, 3
      %s65 = ssub.s32 %s20, %s32
      %s66 = ssub.s32 %s62, %s64
      %s67 = sor.u32 %s65, %s66
      %p68 = scmp.eq.s32.totalorder %s67, 0
      %s70 = sadd.s32 %s69, 1
      %s71 = scalar_select %p68, %s69, %s70
      %p74 = pneg %p68
      %p75 = scmp.eq.s32.totalorder %s13, 1
      %p76 = por %p74, %p75
      %p77 = scmp.ne.s32.totalorder %s69, %s72
      %p78 = scmp.eq.s32.totalorder %s13, 0
      %p79 = por %p77, %p78
      %p80 = scmp.ne.s32.totalorder %s69, %s72
      %p81 = scmp.eq.s32.totalorder %s18, 1
      %p82 = por %p80, %p81
      %p83 = scmp.ne.s32.totalorder %s72, %s73
      %p84 = scmp.eq.s32.totalorder %s18, 0
      %p85 = por %p83, %p84
      %p86 = scmp.ne.s32.totalorder %s72, %s73
      %p87 = scmp.eq.s32.totalorder %s19, 1
      %p88 = por %p86, %p87
      %p90 = scmp.ne.s32.totalorder %s73, %s89
      %p91 = scmp.eq.s32.totalorder %s19, 0
      %p92 = por %p90, %p91
      %s94 = sadd.s32 %s93, 1
      %p97 = scmp.eq.s32.totalorder %s13, 1
      %p98 = scmp.ne.s32.totalorder %s93, %s95
      %p99 = scmp.eq.s32.totalorder %s13, 0
      %p100 = por %p98, %p99
      %p101 = scmp.ne.s32.totalorder %s93, %s95
      %p102 = scmp.eq.s32.totalorder %s18, 1
      %p103 = por %p101, %p102
      %p104 = scmp.ne.s32.totalorder %s95, %s96
      %p105 = scmp.eq.s32.totalorder %s18, 0
      %p106 = por %p104, %p105
      %p107 = scmp.ne.s32.totalorder %s95, %s96
      %p108 = scmp.eq.s32.totalorder %s19, 1
      %p109 = por %p107, %p108
      %p111 = scmp.ne.s32.totalorder %s96, %s110
      %p112 = scmp.eq.s32.totalorder %s19, 0
      %p113 = por %p111, %p112
      %s115 = sadd.s32 %s114, 1
      %p118 = scmp.eq.s32.totalorder %s13, 1
      %p119 = scmp.ne.s32.totalorder %s114, %s116
      %p120 = scmp.eq.s32.totalorder %s13, 0
      %p121 = por %p119, %p120
      %p122 = scmp.ne.s32.totalorder %s114, %s116
      %p123 = scmp.eq.s32.totalorder %s18, 1
      %p124 = por %p122, %p123
      %p125 = scmp.ne.s32.totalorder %s116, %s117
      %p126 = scmp.eq.s32.totalorder %s18, 0
      %p127 = por %p125, %p126
      %p128 = scmp.ne.s32.totalorder %s116, %s117
      %p129 = scmp.eq.s32.totalorder %s19, 1
      %p130 = por %p128, %p129
      %p132 = scmp.ne.s32.totalorder %s117, %s131
      %p133 = scmp.eq.s32.totalorder %s19, 0
      %p134 = por %p132, %p133
      %s135 = ssub.s32 %s20, %s32
      %s136 = ssub.s32 %s21, %s28
      %s137 = sor.u32 %s135, %s136
      %p138 = scmp.eq.s32.totalorder %s137, 0
      %s140 = sadd.s32 %s139, 1
      %s141 = scalar_select %p138, %s139, %s140
      %p144 = pneg %p138
      %p145 = scmp.eq.s32.totalorder %s13, 1
      %p146 = por %p144, %p145
      %p147 = scmp.ne.s32.totalorder %s139, %s142
      %p148 = scmp.eq.s32.totalorder %s13, 0
      %p149 = por %p147, %p148
      %p150 = scmp.ne.s32.totalorder %s139, %s142
      %p151 = scmp.eq.s32.totalorder %s18, 1
      %p152 = por %p150, %p151
      %p153 = scmp.ne.s32.totalorder %s142, %s143
      %p154 = scmp.eq.s32.totalorder %s18, 0
      %p155 = por %p153, %p154
      %p156 = scmp.ne.s32.totalorder %s142, %s143
      %p157 = scmp.eq.s32.totalorder %s19, 1
      %p158 = por %p156, %p157
      %p160 = scmp.ne.s32.totalorder %s143, %s159
      %p161 = scmp.eq.s32.totalorder %s19, 0
      %p162 = por %p160, %p161
      %p163 = scmp.le.s32.totalorder 1, %s13
      %p164 = scmp.lt.s32.totalorder %s13, 3
      %p165 = pnand %p163, %p164
      %p166 = pneg %p165
      // Predicated region
      $region9: #{tpu_custom_call.1} parent=5 // pred_check
        _
      $region10: #{tpu_custom_call.1} parent=5 // pred_check_branch
        %168 = sbr.rel (%p165) target = $region12
      $region11: #{tpu_custom_call.1} parent=5 // pred_region
        %s169 = ssub.s32 %s13, 1
        // Predicated region
        $region13: #{tpu_custom_call.1} parent=11 // pred_check
          %p170 = pneg %p106
        $region14: #{tpu_custom_call.1} parent=11 // pred_check_branch
          %172 = sbr.rel (%p170) target = $region16
        $region15: #{tpu_custom_call.1} parent=11 // pred_region
          _
        $region16: #{tpu_custom_call.1} parent=11 // pred_fallthru
          _
        // Predicated region
        $region17: #{tpu_custom_call.1} parent=11 // pred_check
          %p173 = pneg %p127
        $region18: #{tpu_custom_call.1} parent=11 // pred_check_branch
          %175 = sbr.rel (%p173) target = $region20
        $region19: #{tpu_custom_call.1} parent=11 // pred_region
          _
        $region20: #{tpu_custom_call.1} parent=11 // pred_fallthru
          _
      $region12: #{tpu_custom_call.1} parent=5 // pred_fallthru
        _
      %p176 = scmp.lt.s32.totalorder %s13, 2
      // Predicated region
      $region21: #{tpu_custom_call.1} parent=5 // pred_check
        %p177 = pneg %p176
      $region22: #{tpu_custom_call.1} parent=5 // pred_check_branch
        %179 = sbr.rel (%p177) target = $region24
      $region23: #{tpu_custom_call.1} parent=5 // pred_region
        // Predicated region
        $region25: #{tpu_custom_call.1} parent=23 // pred_check
          %p180 = pneg %p47
        $region26: #{tpu_custom_call.1} parent=23 // pred_check_branch
          %182 = sbr.rel (%p180) target = $region28
        $region27: #{tpu_custom_call.1} parent=23 // pred_region
          %s183 = smul.u32 3, %s21
          %s184 = ssub.s32 4, %s183
          %p185 = scmp.lt.s32.totalorder %s184, 3
          %s186 = scalar_select %p185, %s184, 3
          %s187 = smul.u32 64, %s186
          %p188 = scmp.lt.s32.totalorder %s20, 1
          %s189 = scalar_select %p188, %s20, 1
          %p190 = scmp.lt.s32.totalorder %s183, 3
          %s191 = scalar_select %p190, %s183, 3
          %s192 = smul.addr %s189, 4
          %s193 = sadd.s32 %s191, %s192
          %s194 = smul.addr %s193, 4
          %s195 = scalar_lea.vmem %s0, %s194
          %s196 = smul.u32 3, %s21
          %s197 = ssub.s32 4, %s196
          %p198 = scmp.lt.s32.totalorder %s197, 3
          %s199 = scalar_select %p198, %s197, 3
          %s200 = smul.u32 64, %s199
        $region28: #{tpu_custom_call.1} parent=23 // pred_fallthru
          _
        // Predicated region
        $region29: #{tpu_custom_call.1} parent=23 // pred_check
          %p201 = pneg %p79
        $region30: #{tpu_custom_call.1} parent=23 // pred_check_branch
          %203 = sbr.rel (%p201) target = $region32
        $region31: #{tpu_custom_call.1} parent=23 // pred_region
          %s204 = sadd.s32 %s21, 1
          %s205 = smul.u32 %s204, 3
          %p206 = scmp.lt.s32.totalorder %s20, 1
          %s207 = scalar_select %p206, %s20, 1
          %p208 = scmp.lt.s32.totalorder %s205, 3
          %s209 = scalar_select %p208, %s205, 3
          %s210 = smul.addr %s207, 4
          %s211 = sadd.s32 %s209, %s210
          %s212 = smul.addr %s211, 4
          %s213 = scalar_lea.vmem %s1, %s212
          %s214 = sadd.s32 %s21, 1
          %s215 = smul.u32 %s214, 3
        $region32: #{tpu_custom_call.1} parent=23 // pred_fallthru
          _
      $region24: #{tpu_custom_call.1} parent=5 // pred_fallthru
        _
      %p216 = scmp.le.s32.totalorder 1, %s13
      %p217 = scmp.lt.s32.totalorder %s13, 3
      %p218 = pnand %p216, %p217
      %p219 = pneg %p218
      // Predicated region
      $region33: #{tpu_custom_call.1} parent=5 // pred_check
        _
      $region34: #{tpu_custom_call.1} parent=5 // pred_check_branch
        %221 = sbr.rel (%p218) target = $region36
      $region35: #{tpu_custom_call.1} parent=5 // pred_region
        %s222 = ssub.s32 %s13, 1
        %s223 = smul.u32 3, %s23
        %s224 = ssub.s32 4, %s223
        %p225 = scmp.lt.s32.totalorder %s224, 3
        %s226 = scalar_select %p225, %s224, 3
        %s227 = smul.u32 64, %s226
        %p228 = scmp.lt.s32.totalorder %s22, 1
        %s229 = scalar_select %p228, %s22, 1
        %p230 = scmp.lt.s32.totalorder %s223, 3
        %s231 = scalar_select %p230, %s223, 3
        %s232 = smul.addr %s229, 4
        %s233 = sadd.s32 %s231, %s232
        %s234 = smul.addr %s233, 4
        %s235 = scalar_lea.vmem %s0, %s234
        %p236 = pneg %p53
        %p237 = pneg %p50
        %s238 = sadd.s32 %s23, 1
        %s239 = smul.u32 %s238, 3
        %p240 = scmp.lt.s32.totalorder %s22, 1
        %s241 = scalar_select %p240, %s22, 1
        %p242 = scmp.lt.s32.totalorder %s239, 3
        %s243 = scalar_select %p242, %s239, 3
        %s244 = smul.addr %s241, 4
        %s245 = sadd.s32 %s243, %s244
        %s246 = smul.addr %s245, 4
        %s247 = scalar_lea.vmem %s1, %s246
        %p248 = pneg %p85
        %p249 = pneg %p82
        %p250 = pneg %p106
        %p251 = pneg %p103
        %p252 = pneg %p127
        %p253 = pneg %p124
        %p254 = pneg %p155
        %p255 = pneg %p152
        %s256 = sand.u32 %s142, 1
        %s257 = scalar_lea.sflag [#allocation4], %s256
        %s258 = sand.u32 %s142, 1
        %s259 = smul.addr %s258, 24
        %s260 = scalar_lea.vmem [#allocation3], %s259
        %s261 = smul.u32 3, %s23
        %s262 = ssub.s32 4, %s261
        %p263 = scmp.lt.s32.totalorder %s262, 3
        %s264 = scalar_select %p263, %s262, 3
        %s265 = smul.u32 64, %s264
        %p266 = scmp.lt.s32.totalorder %s22, 1
        %s267 = scalar_select %p266, %s22, 1
        %p268 = scmp.lt.s32.totalorder %s261, 3
        %s269 = scalar_select %p268, %s261, 3
        %s270 = smul.addr %s267, 4
        %s271 = sadd.s32 %s269, %s270
        %s272 = smul.addr %s271, 4
        %s273 = scalar_lea.vmem %s0, %s272
        %s274 = smul.u32 3, %s23
        %s275 = ssub.s32 4, %s274
        %p276 = scmp.lt.s32.totalorder %s275, 3
        %s277 = scalar_select %p276, %s275, 3
        %s278 = smul.u32 64, %s277
        %s279 = sadd.s32 %s23, 1
        %s280 = smul.u32 %s279, 3
        %p281 = scmp.lt.s32.totalorder %s22, 1
        %s282 = scalar_select %p281, %s22, 1
        %p283 = scmp.lt.s32.totalorder %s280, 3
        %s284 = scalar_select %p283, %s280, 3
        %s285 = smul.addr %s282, 4
        %s286 = sadd.s32 %s284, %s285
        %s287 = smul.addr %s286, 4
        %s288 = scalar_lea.vmem %s1, %s287
        %s289 = sadd.s32 %s23, 1
        %s290 = smul.u32 %s289, 3
        %s291 = smul.u32 3, %s23
        %v292 = vld [vmem:[%s273] sm:$0xff]
        %v293 = vld [vmem:[%s273 + $0x8] sm:$0xf]
        %294 = vst [vmem:[#allocation2] sm:$0xff] %v292
        %295 = vst [vmem:[#allocation2 + $0x8] sm:$0xf] %v293
        %v296 = vld [vmem:[%s288] sm:$0xf]
        %297 = vst [vmem:[#allocation2 + $0xc] sm:$0xf] %v296
        %v298 = vld [vmem:[%s3] sm:$0xff]
        %300 = vset.pattern.permute.xlu0 0
        %301 = vperm.xlu0 %300, %v298
        %v302 = vpop.permute.xlu0 %301
        %v304 = vld [vmem:[%s2] sm:$0xff]
        %v305 = vld [vmem:[#allocation2] sm:$0xff]
        %v306 = vld [vmem:[#allocation2 + $0x8] sm:$0xf]
        %v309 = vcombine.high %v305, %v305
        %vm310 = vcmask 31744
        %v312 = vsel %vm310, %v304, 0
        %vm314 = vcmask 1043456
        %v315 = vsel %vm314, %v305, 0
        %v317 = vsel %vm314, %v309, 0
        %v319 = vsel %vm314, %v306, 0
        %321 = vmatprep.subr.mxu0 %v317
        %322 = vmatpush1.msra.mxu0 %v315
        %323 = vmatprep.subr.mxu0 0.0
        %324 = vmatpush1.msra.mxu0 0.0
        %325 = vmatprep.subr.mxu0 0.0
        %326 = vmatpush1.msra.mxu0 0.0
        %327 = vmatprep.subr.mxu0 0.0
        %328 = vmatpush1.msra.mxu0 0.0
        %329 = vmatprep.subr.mxu0 0.0
        %330 = vmatpush1.msra.mxu0 0.0
        %331 = vmatprep.subr.mxu0 0.0
        %332 = vmatpush1.msra.mxu0 0.0
        %333 = vmatprep.subr.mxu0 0.0
        %334 = vmatpush1.msra.mxu0 0.0
        %335 = vmatprep.subr.mxu0 0.0
        %336 = vmatpush1.msra.mxu0 0.0
        %337 = vmatprep.subr.mxu0 0.0
        %338 = vmatpush1.msra.mxu0 0.0
        %339 = vmatprep.subr.mxu0 0.0
        %340 = vmatpush1.msra.mxu0 0.0
        %341 = vmatprep.subr.mxu0 0.0
        %342 = vmatpush1.msra.mxu0 0.0
        %343 = vmatprep.subr.mxu0 0.0
        %344 = vmatpush1.msra.mxu0 0.0
        %345 = vmatprep.subr.mxu0 0.0
        %346 = vmatpush1.msra.mxu0 0.0
        %347 = vmatprep.subr.mxu0 0.0
        %348 = vmatpush1.msra.mxu0 0.0
        %349 = vmatprep.subr.mxu0 0.0
        %350 = vmatpush1.msra.mxu0 0.0
        %351 = vmatprep.subr.mxu0 0.0
        %352 = vmatpush1.msra.mxu0 0.0
        %353 = vmatprep.subr.mxu0 0.0
        %354 = vmatpush1.msra.mxu0 0.0
        %355 = vmatprep.subr.mxu0 0.0
        %356 = vmatpush1.msra.mxu0 0.0
        %357 = vmatprep.subr.mxu0 0.0
        %358 = vmatpush1.msra.mxu0 0.0
        %359 = vmatprep.subr.mxu0 0.0
        %360 = vmatpush1.msra.mxu0 0.0
        %361 = vmatprep.subr.mxu0 0.0
        %362 = vmatpush1.msra.mxu0 0.0
        %363 = vmatprep.subr.mxu0 0.0
        %364 = vmatpush1.msra.mxu0 0.0
        %365 = vmatprep.subr.mxu0 0.0
        %366 = vmatpush1.msra.mxu0 0.0
        %367 = vmatprep.subr.mxu0 0.0
        %368 = vmatpush1.msra.mxu0 0.0
        %369 = vmatprep.subr.mxu0 0.0
        %370 = vmatpush1.msra.mxu0 0.0
        %371 = vmatprep.subr.mxu0 0.0
        %372 = vmatpush1.msra.mxu0 0.0
        %373 = vmatprep.subr.mxu0 0.0
        %374 = vmatpush1.msra.mxu0 0.0
        %375 = vmatprep.subr.mxu0 0.0
        %376 = vmatpush1.msra.mxu0 0.0
        %377 = vmatprep.subr.mxu0 0.0
        %378 = vmatpush1.msra.mxu0 0.0
        %379 = vmatprep.subr.mxu0 0.0
        %380 = vmatpush1.msra.mxu0 0.0
        %381 = vmatprep.subr.mxu0 0.0
        %382 = vmatpush1.msra.mxu0 0.0
        %383 = vmatprep.subr.mxu0 0.0
        %384 = vmatpush1.msra.mxu0 0.0
        %385 = vmatprep.mubr.f32.mxu0 0.0
        %386 = vmatmul.mubr.f32.gmra.mrb[0].mxu0 %v312
        %v387 = vpop.f32.mrb[0].mxu0
        %v388 = vadd.f32 0.0, %v387
        %v389 = vpop.f32.mrb[0].mxu0
        %v390 = vadd.f32 0.0, %v389
        %391 = vdwg.mxu0
        %392 = vmatprep.subr.mxu0 0.0
        %393 = vmatpush1.msra.mxu0 %v319
        %394 = vmatprep.subr.mxu0 0.0
        %395 = vmatpush1.msra.mxu0 0.0
        %396 = vmatprep.subr.mxu0 0.0
        %397 = vmatpush1.msra.mxu0 0.0
        %398 = vmatprep.subr.mxu0 0.0
        %399 = vmatpush1.msra.mxu0 0.0
        %400 = vmatprep.subr.mxu0 0.0
        %401 = vmatpush1.msra.mxu0 0.0
        %402 = vmatprep.subr.mxu0 0.0
        %403 = vmatpush1.msra.mxu0 0.0
        %404 = vmatprep.subr.mxu0 0.0
        %405 = vmatpush1.msra.mxu0 0.0
        %406 = vmatprep.subr.mxu0 0.0
        %407 = vmatpush1.msra.mxu0 0.0
        %408 = vmatprep.subr.mxu0 0.0
        %409 = vmatpush1.msra.mxu0 0.0
        %410 = vmatprep.subr.mxu0 0.0
        %411 = vmatpush1.msra.mxu0 0.0
        %412 = vmatprep.subr.mxu0 0.0
        %413 = vmatpush1.msra.mxu0 0.0
        %414 = vmatprep.subr.mxu0 0.0
        %415 = vmatpush1.msra.mxu0 0.0
        %416 = vmatprep.subr.mxu0 0.0
        %417 = vmatpush1.msra.mxu0 0.0
        %418 = vmatprep.subr.mxu0 0.0
        %419 = vmatpush1.msra.mxu0 0.0
        %420 = vmatprep.subr.mxu0 0.0
        %421 = vmatpush1.msra.mxu0 0.0
        %422 = vmatprep.subr.mxu0 0.0
        %423 = vmatpush1.msra.mxu0 0.0
        %424 = vmatprep.subr.mxu0 0.0
        %425 = vmatpush1.msra.mxu0 0.0
        %426 = vmatprep.subr.mxu0 0.0
        %427 = vmatpush1.msra.mxu0 0.0
        %428 = vmatprep.subr.mxu0 0.0
        %429 = vmatpush1.msra.mxu0 0.0
        %430 = vmatprep.subr.mxu0 0.0
        %431 = vmatpush1.msra.mxu0 0.0
        %432 = vmatprep.subr.mxu0 0.0
        %433 = vmatpush1.msra.mxu0 0.0
        %434 = vmatprep.subr.mxu0 0.0
        %435 = vmatpush1.msra.mxu0 0.0
        %436 = vmatprep.subr.mxu0 0.0
        %437 = vmatpush1.msra.mxu0 0.0
        %438 = vmatprep.subr.mxu0 0.0
        %439 = vmatpush1.msra.mxu0 0.0
        %440 = vmatprep.subr.mxu0 0.0
        %441 = vmatpush1.msra.mxu0 0.0
        %442 = vmatprep.subr.mxu0 0.0
        %443 = vmatpush1.msra.mxu0 0.0
        %444 = vmatprep.subr.mxu0 0.0
        %445 = vmatpush1.msra.mxu0 0.0
        %446 = vmatprep.subr.mxu0 0.0
        %447 = vmatpush1.msra.mxu0 0.0
        %448 = vmatprep.subr.mxu0 0.0
        %449 = vmatpush1.msra.mxu0 0.0
        %450 = vmatprep.subr.mxu0 0.0
        %451 = vmatpush1.msra.mxu0 0.0
        %452 = vmatprep.subr.mxu0 0.0
        %453 = vmatpush1.msra.mxu0 0.0
        %454 = vmatprep.subr.mxu0 0.0
        %455 = vmatpush1.msra.mxu0 0.0
        %456 = vmatprep.mubr.f32.mxu0 0.0
        %457 = vmatmul.mubr.f32.gmra.mrb[0].mxu0 %v312
        %v458 = vpop.f32.mrb[0].mxu0
        %v459 = vadd.f32 0.0, %v458
        %v460 = vpop.f32.mrb[0].mxu0
        %461 = vdwg.mxu0
        %v462 = vadd.f32 %v302, %v388
        %v463 = vadd.f32 %v302, %v390
        %v464 = vadd.f32 %v302, %v459
        %s465 = scalar_lea.vmem %s2, 8
        %v466 = vld [vmem:[%s465] sm:$0xff]
        %v467 = vld [vmem:[#allocation2] sm:$0xff]
        %v468 = vld [vmem:[#allocation2 + $0x8] sm:$0xff]
        %v471 = vcombine.high %v467, %v467
        %v472 = vcombine.high %v468, %v468
        %473 = vrot.lane.b32.xlu0 %v467, 127
        %v474 = vpop.permute.xlu0 %473
        %475 = vrot.lane.b32.xlu0 %v471, 127
        %v476 = vpop.permute.xlu0 %475
        %477 = vrot.lane.b32.xlu0 %v468, 127
        %v478 = vpop.permute.xlu0 %477
        %479 = vrot.lane.b32.xlu0 %v472, 127
        %v480 = vpop.permute.xlu0 %479
        %vm481 = vcmask 1039360
        %v482 = vsel %vm481, %v474, %v476
        %v483 = vsel %vm481, %v476, %v478
        %v484 = vsel %vm481, %v478, %v480
        %v486 = vsel %vm310, %v466, 0
        %v488 = vsel %vm314, %v482, 0
        %v490 = vsel %vm314, %v483, 0
        %v492 = vsel %vm314, %v484, 0
        %494 = vmatprep.subr.mxu0 %v490
        %495 = vmatpush1.msra.mxu0 %v488
        %496 = vmatprep.subr.mxu0 0.0
        %497 = vmatpush1.msra.mxu0 0.0
        %498 = vmatprep.subr.mxu0 0.0
        %499 = vmatpush1.msra.mxu0 0.0
        %500 = vmatprep.subr.mxu0 0.0
        %501 = vmatpush1.msra.mxu0 0.0
        %502 = vmatprep.subr.mxu0 0.0
        %503 = vmatpush1.msra.mxu0 0.0
        %504 = vmatprep.subr.mxu0 0.0
        %505 = vmatpush1.msra.mxu0 0.0
        %506 = vmatprep.subr.mxu0 0.0
        %507 = vmatpush1.msra.mxu0 0.0
        %508 = vmatprep.subr.mxu0 0.0
        %509 = vmatpush1.msra.mxu0 0.0
        %510 = vmatprep.subr.mxu0 0.0
        %511 = vmatpush1.msra.mxu0 0.0
        %512 = vmatprep.subr.mxu0 0.0
        %513 = vmatpush1.msra.mxu0 0.0
        %514 = vmatprep.subr.mxu0 0.0
        %515 = vmatpush1.msra.mxu0 0.0
        %516 = vmatprep.subr.mxu0 0.0
        %517 = vmatpush1.msra.mxu0 0.0
        %518 = vmatprep.subr.mxu0 0.0
        %519 = vmatpush1.msra.mxu0 0.0
        %520 = vmatprep.subr.mxu0 0.0
        %521 = vmatpush1.msra.mxu0 0.0
        %522 = vmatprep.subr.mxu0 0.0
        %523 = vmatpush1.msra.mxu0 0.0
        %524 = vmatprep.subr.mxu0 0.0
        %525 = vmatpush1.msra.mxu0 0.0
        %526 = vmatprep.subr.mxu0 0.0
        %527 = vmatpush1.msra.mxu0 0.0
        %528 = vmatprep.subr.mxu0 0.0
        %529 = vmatpush1.msra.mxu0 0.0
        %530 = vmatprep.subr.mxu0 0.0
        %531 = vmatpush1.msra.mxu0 0.0
        %532 = vmatprep.subr.mxu0 0.0
        %533 = vmatpush1.msra.mxu0 0.0
        %534 = vmatprep.subr.mxu0 0.0
        %535 = vmatpush1.msra.mxu0 0.0
        %536 = vmatprep.subr.mxu0 0.0
        %537 = vmatpush1.msra.mxu0 0.0
        %538 = vmatprep.subr.mxu0 0.0
        %539 = vmatpush1.msra.mxu0 0.0
        %540 = vmatprep.subr.mxu0 0.0
        %541 = vmatpush1.msra.mxu0 0.0
        %542 = vmatprep.subr.mxu0 0.0
        %543 = vmatpush1.msra.mxu0 0.0
        %544 = vmatprep.subr.mxu0 0.0
        %545 = vmatpush1.msra.mxu0 0.0
        %546 = vmatprep.subr.mxu0 0.0
        %547 = vmatpush1.msra.mxu0 0.0
        %548 = vmatprep.subr.mxu0 0.0
        %549 = vmatpush1.msra.mxu0 0.0
        %550 = vmatprep.subr.mxu0 0.0
        %551 = vmatpush1.msra.mxu0 0.0
        %552 = vmatprep.subr.mxu0 0.0
        %553 = vmatpush1.msra.mxu0 0.0
        %554 = vmatprep.subr.mxu0 0.0
        %555 = vmatpush1.msra.mxu0 0.0
        %556 = vmatprep.subr.mxu0 0.0
        %557 = vmatpush1.msra.mxu0 0.0
        %558 = vmatprep.mubr.f32.mxu0 0.0
        %559 = vmatmul.mubr.f32.gmra.mrb[0].mxu0 %v486
        %v560 = vpop.f32.mrb[0].mxu0
        %v561 = vadd.f32 0.0, %v560
        %v562 = vpop.f32.mrb[0].mxu0
        %v563 = vadd.f32 0.0, %v562
        %564 = vdwg.mxu0
        %565 = vmatprep.subr.mxu0 0.0
        %566 = vmatpush1.msra.mxu0 %v492
        %567 = vmatprep.subr.mxu0 0.0
        %568 = vmatpush1.msra.mxu0 0.0
        %569 = vmatprep.subr.mxu0 0.0
        %570 = vmatpush1.msra.mxu0 0.0
        %571 = vmatprep.subr.mxu0 0.0
        %572 = vmatpush1.msra.mxu0 0.0
        %573 = vmatprep.subr.mxu0 0.0
        %574 = vmatpush1.msra.mxu0 0.0
        %575 = vmatprep.subr.mxu0 0.0
        %576 = vmatpush1.msra.mxu0 0.0
        %577 = vmatprep.subr.mxu0 0.0
        %578 = vmatpush1.msra.mxu0 0.0
        %579 = vmatprep.subr.mxu0 0.0
        %580 = vmatpush1.msra.mxu0 0.0
        %581 = vmatprep.subr.mxu0 0.0
        %582 = vmatpush1.msra.mxu0 0.0
        %583 = vmatprep.subr.mxu0 0.0
        %584 = vmatpush1.msra.mxu0 0.0
        %585 = vmatprep.subr.mxu0 0.0
        %586 = vmatpush1.msra.mxu0 0.0
        %587 = vmatprep.subr.mxu0 0.0
        %588 = vmatpush1.msra.mxu0 0.0
        %589 = vmatprep.subr.mxu0 0.0
        %590 = vmatpush1.msra.mxu0 0.0
        %591 = vmatprep.subr.mxu0 0.0
        %592 = vmatpush1.msra.mxu0 0.0
        %593 = vmatprep.subr.mxu0 0.0
        %594 = vmatpush1.msra.mxu0 0.0
        %595 = vmatprep.subr.mxu0 0.0
        %596 = vmatpush1.msra.mxu0 0.0
        %597 = vmatprep.subr.mxu0 0.0
        %598 = vmatpush1.msra.mxu0 0.0
        %599 = vmatprep.subr.mxu0 0.0
        %600 = vmatpush1.msra.mxu0 0.0
        %601 = vmatprep.subr.mxu0 0.0
        %602 = vmatpush1.msra.mxu0 0.0
        %603 = vmatprep.subr.mxu0 0.0
        %604 = vmatpush1.msra.mxu0 0.0
        %605 = vmatprep.subr.mxu0 0.0
        %606 = vmatpush1.msra.mxu0 0.0
        %607 = vmatprep.subr.mxu0 0.0
        %608 = vmatpush1.msra.mxu0 0.0
        %609 = vmatprep.subr.mxu0 0.0
        %610 = vmatpush1.msra.mxu0 0.0
        %611 = vmatprep.subr.mxu0 0.0
        %612 = vmatpush1.msra.mxu0 0.0
        %613 = vmatprep.subr.mxu0 0.0
        %614 = vmatpush1.msra.mxu0 0.0
        %615 = vmatprep.subr.mxu0 0.0
        %616 = vmatpush1.msra.mxu0 0.0
        %617 = vmatprep.subr.mxu0 0.0
        %618 = vmatpush1.msra.mxu0 0.0
        %619 = vmatprep.subr.mxu0 0.0
        %620 = vmatpush1.msra.mxu0 0.0
        %621 = vmatprep.subr.mxu0 0.0
        %622 = vmatpush1.msra.mxu0 0.0
        %623 = vmatprep.subr.mxu0 0.0
        %624 = vmatpush1.msra.mxu0 0.0
        %625 = vmatprep.subr.mxu0 0.0
        %626 = vmatpush1.msra.mxu0 0.0
        %627 = vmatprep.subr.mxu0 0.0
        %628 = vmatpush1.msra.mxu0 0.0
        %629 = vmatprep.mubr.f32.mxu0 0.0
        %630 = vmatmul.mubr.f32.gmra.mrb[0].mxu0 %v486
        %v631 = vpop.f32.mrb[0].mxu0
        %v632 = vadd.f32 0.0, %v631
        %v633 = vpop.f32.mrb[0].mxu0
        %634 = vdwg.mxu0
        %v635 = vadd.f32 %v462, %v561
        %v636 = vadd.f32 %v463, %v563
        %v637 = vadd.f32 %v464, %v632
        %s638 = scalar_lea.vmem %s2, 16
        %v639 = vld [vmem:[%s638] sm:$0xff]
        %v640 = vld [vmem:[#allocation2] sm:$0xff]
        %v641 = vld [vmem:[#allocation2 + $0x8] sm:$0xff]
        %v644 = vcombine.high %v640, %v640
        %v645 = vcombine.high %v641, %v641
        %646 = vrot.lane.b32.xlu0 %v640, 126
        %v647 = vpop.permute.xlu0 %646
        %648 = vrot.lane.b32.xlu0 %v644, 126
        %v649 = vpop.permute.xlu0 %648
        %650 = vrot.lane.b32.xlu0 %v641, 126
        %v651 = vpop.permute.xlu0 %650
        %652 = vrot.lane.b32.xlu0 %v645, 126
        %v653 = vpop.permute.xlu0 %652
        %vm654 = vcmask 1031168
        %v655 = vsel %vm654, %v647, %v649
        %v656 = vsel %vm654, %v649, %v651
        %v657 = vsel %vm654, %v651, %v653
        %v659 = vsel %vm310, %v639, 0
        %v661 = vsel %vm314, %v655, 0
        %v663 = vsel %vm314, %v656, 0
        %v665 = vsel %vm314, %v657, 0
        %667 = vmatprep.subr.mxu0 %v663
        %668 = vmatpush1.msra.mxu0 %v661
        %669 = vmatprep.subr.mxu0 0.0
        %670 = vmatpush1.msra.mxu0 0.0
        %671 = vmatprep.subr.mxu0 0.0
        %672 = vmatpush1.msra.mxu0 0.0
        %673 = vmatprep.subr.mxu0 0.0
        %674 = vmatpush1.msra.mxu0 0.0
        %675 = vmatprep.subr.mxu0 0.0
        %676 = vmatpush1.msra.mxu0 0.0
        %677 = vmatprep.subr.mxu0 0.0
        %678 = vmatpush1.msra.mxu0 0.0
        %679 = vmatprep.subr.mxu0 0.0
        %680 = vmatpush1.msra.mxu0 0.0
        %681 = vmatprep.subr.mxu0 0.0
        %682 = vmatpush1.msra.mxu0 0.0
        %683 = vmatprep.subr.mxu0 0.0
        %684 = vmatpush1.msra.mxu0 0.0
        %685 = vmatprep.subr.mxu0 0.0
        %686 = vmatpush1.msra.mxu0 0.0
        %687 = vmatprep.subr.mxu0 0.0
        %688 = vmatpush1.msra.mxu0 0.0
        %689 = vmatprep.subr.mxu0 0.0
        %690 = vmatpush1.msra.mxu0 0.0
        %691 = vmatprep.subr.mxu0 0.0
        %692 = vmatpush1.msra.mxu0 0.0
        %693 = vmatprep.subr.mxu0 0.0
        %694 = vmatpush1.msra.mxu0 0.0
        %695 = vmatprep.subr.mxu0 0.0
        %696 = vmatpush1.msra.mxu0 0.0
        %697 = vmatprep.subr.mxu0 0.0
        %698 = vmatpush1.msra.mxu0 0.0
        %699 = vmatprep.subr.mxu0 0.0
        %700 = vmatpush1.msra.mxu0 0.0
        %701 = vmatprep.subr.mxu0 0.0
        %702 = vmatpush1.msra.mxu0 0.0
        %703 = vmatprep.subr.mxu0 0.0
        %704 = vmatpush1.msra.mxu0 0.0
        %705 = vmatprep.subr.mxu0 0.0
        %706 = vmatpush1.msra.mxu0 0.0
        %707 = vmatprep.subr.mxu0 0.0
        %708 = vmatpush1.msra.mxu0 0.0
        %709 = vmatprep.subr.mxu0 0.0
        %710 = vmatpush1.msra.mxu0 0.0
        %711 = vmatprep.subr.mxu0 0.0
        %712 = vmatpush1.msra.mxu0 0.0
        %713 = vmatprep.subr.mxu0 0.0
        %714 = vmatpush1.msra.mxu0 0.0
        %715 = vmatprep.subr.mxu0 0.0
        %716 = vmatpush1.msra.mxu0 0.0
        %717 = vmatprep.subr.mxu0 0.0
        %718 = vmatpush1.msra.mxu0 0.0
        %719 = vmatprep.subr.mxu0 0.0
        %720 = vmatpush1.msra.mxu0 0.0
        %721 = vmatprep.subr.mxu0 0.0
        %722 = vmatpush1.msra.mxu0 0.0
        %723 = vmatprep.subr.mxu0 0.0
        %724 = vmatpush1.msra.mxu0 0.0
        %725 = vmatprep.subr.mxu0 0.0
        %726 = vmatpush1.msra.mxu0 0.0
        %727 = vmatprep.subr.mxu0 0.0
        %728 = vmatpush1.msra.mxu0 0.0
        %729 = vmatprep.subr.mxu0 0.0
        %730 = vmatpush1.msra.mxu0 0.0
        %731 = vmatprep.mubr.f32.mxu0 0.0
        %732 = vmatmul.mubr.f32.gmra.mrb[0].mxu0 %v659
        %v733 = vpop.f32.mrb[0].mxu0
        %v734 = vadd.f32 0.0, %v733
        %v735 = vpop.f32.mrb[0].mxu0
        %v736 = vadd.f32 0.0, %v735
        %737 = vdwg.mxu0
        %738 = vmatprep.subr.mxu0 0.0
        %739 = vmatpush1.msra.mxu0 %v665
        %740 = vmatprep.subr.mxu0 0.0
        %741 = vmatpush1.msra.mxu0 0.0
        %742 = vmatprep.subr.mxu0 0.0
        %743 = vmatpush1.msra.mxu0 0.0
        %744 = vmatprep.subr.mxu0 0.0
        %745 = vmatpush1.msra.mxu0 0.0
        %746 = vmatprep.subr.mxu0 0.0
        %747 = vmatpush1.msra.mxu0 0.0
        %748 = vmatprep.subr.mxu0 0.0
        %749 = vmatpush1.msra.mxu0 0.0
        %750 = vmatprep.subr.mxu0 0.0
        %751 = vmatpush1.msra.mxu0 0.0
        %752 = vmatprep.subr.mxu0 0.0
        %753 = vmatpush1.msra.mxu0 0.0
        %754 = vmatprep.subr.mxu0 0.0
        %755 = vmatpush1.msra.mxu0 0.0
        %756 = vmatprep.subr.mxu0 0.0
        %757 = vmatpush1.msra.mxu0 0.0
        %758 = vmatprep.subr.mxu0 0.0
        %759 = vmatpush1.msra.mxu0 0.0
        %760 = vmatprep.subr.mxu0 0.0
        %761 = vmatpush1.msra.mxu0 0.0
        %762 = vmatprep.subr.mxu0 0.0
        %763 = vmatpush1.msra.mxu0 0.0
        %764 = vmatprep.subr.mxu0 0.0
        %765 = vmatpush1.msra.mxu0 0.0
        %766 = vmatprep.subr.mxu0 0.0
        %767 = vmatpush1.msra.mxu0 0.0
        %768 = vmatprep.subr.mxu0 0.0
        %769 = vmatpush1.msra.mxu0 0.0
        %770 = vmatprep.subr.mxu0 0.0
        %771 = vmatpush1.msra.mxu0 0.0
        %772 = vmatprep.subr.mxu0 0.0
        %773 = vmatpush1.msra.mxu0 0.0
        %774 = vmatprep.subr.mxu0 0.0
        %775 = vmatpush1.msra.mxu0 0.0
        %776 = vmatprep.subr.mxu0 0.0
        %777 = vmatpush1.msra.mxu0 0.0
        %778 = vmatprep.subr.mxu0 0.0
        %779 = vmatpush1.msra.mxu0 0.0
        %780 = vmatprep.subr.mxu0 0.0
        %781 = vmatpush1.msra.mxu0 0.0
        %782 = vmatprep.subr.mxu0 0.0
        %783 = vmatpush1.msra.mxu0 0.0
        %784 = vmatprep.subr.mxu0 0.0
        %785 = vmatpush1.msra.mxu0 0.0
        %786 = vmatprep.subr.mxu0 0.0
        %787 = vmatpush1.msra.mxu0 0.0
        %788 = vmatprep.subr.mxu0 0.0
        %789 = vmatpush1.msra.mxu0 0.0
        %790 = vmatprep.subr.mxu0 0.0
        %791 = vmatpush1.msra.mxu0 0.0
        %792 = vmatprep.subr.mxu0 0.0
        %793 = vmatpush1.msra.mxu0 0.0
        %794 = vmatprep.subr.mxu0 0.0
        %795 = vmatpush1.msra.mxu0 0.0
        %796 = vmatprep.subr.mxu0 0.0
        %797 = vmatpush1.msra.mxu0 0.0
        %798 = vmatprep.subr.mxu0 0.0
        %799 = vmatpush1.msra.mxu0 0.0
        %800 = vmatprep.subr.mxu0 0.0
        %801 = vmatpush1.msra.mxu0 0.0
        %802 = vmatprep.mubr.f32.mxu0 0.0
        %803 = vmatmul.mubr.f32.gmra.mrb[0].mxu0 %v659
        %v804 = vpop.f32.mrb[0].mxu0
        %v805 = vadd.f32 0.0, %v804
        %v806 = vpop.f32.mrb[0].mxu0
        %807 = vdwg.mxu0
        %v808 = vadd.f32 %v635, %v734
        %v809 = vadd.f32 %v636, %v736
        %v810 = vadd.f32 %v637, %v805
        %s811 = scalar_lea.vmem %s2, 24
        %v812 = vld [vmem:[%s811] sm:$0xff]
        %v813 = vld [vmem:[#allocation2] sm:$0xff]
        %v814 = vld [vmem:[#allocation2 + $0x8] sm:$0xff]
        %v817 = vcombine.high %v813, %v813
        %v818 = vcombine.high %v814, %v814
        %819 = vrot.lane.b32.xlu0 %v813, 110
        %v820 = vpop.permute.xlu0 %819
        %821 = vrot.lane.b32.xlu0 %v817, 110
        %v822 = vpop.permute.xlu0 %821
        %823 = vrot.lane.b32.xlu0 %v814, 110
        %v824 = vpop.permute.xlu0 %823
        %825 = vrot.lane.b32.xlu0 %v818, 110
        %v826 = vpop.permute.xlu0 %825
        %vm827 = vcmask 900096
        %v828 = vsel %vm827, %v820, %v822
        %v829 = vsel %vm827, %v822, %v824
        %v830 = vsel %vm827, %v824, %v826
        %v832 = vsel %vm310, %v812, 0
        %v834 = vsel %vm314, %v828, 0
        %v836 = vsel %vm314, %v829, 0
        %v838 = vsel %vm314, %v830, 0
        %840 = vmatprep.subr.mxu0 %v836
        %841 = vmatpush1.msra.mxu0 %v834
        %842 = vmatprep.subr.mxu0 0.0
        %843 = vmatpush1.msra.mxu0 0.0
        %844 = vmatprep.subr.mxu0 0.0
        %845 = vmatpush1.msra.mxu0 0.0
        %846 = vmatprep.subr.mxu0 0.0
        %847 = vmatpush1.msra.mxu0 0.0
        %848 = vmatprep.subr.mxu0 0.0
        %849 = vmatpush1.msra.mxu0 0.0
        %850 = vmatprep.subr.mxu0 0.0
        %851 = vmatpush1.msra.mxu0 0.0
        %852 = vmatprep.subr.mxu0 0.0
        %853 = vmatpush1.msra.mxu0 0.0
        %854 = vmatprep.subr.mxu0 0.0
        %855 = vmatpush1.msra.mxu0 0.0
        %856 = vmatprep.subr.mxu0 0.0
        %857 = vmatpush1.msra.mxu0 0.0
        %858 = vmatprep.subr.mxu0 0.0
        %859 = vmatpush1.msra.mxu0 0.0
        %860 = vmatprep.subr.mxu0 0.0
        %861 = vmatpush1.msra.mxu0 0.0
        %862 = vmatprep.subr.mxu0 0.0
        %863 = vmatpush1.msra.mxu0 0.0
        %864 = vmatprep.subr.mxu0 0.0
        %865 = vmatpush1.msra.mxu0 0.0
        %866 = vmatprep.subr.mxu0 0.0
        %867 = vmatpush1.msra.mxu0 0.0
        %868 = vmatprep.subr.mxu0 0.0
        %869 = vmatpush1.msra.mxu0 0.0
        %870 = vmatprep.subr.mxu0 0.0
        %871 = vmatpush1.msra.mxu0 0.0
        %872 = vmatprep.subr.mxu0 0.0
        %873 = vmatpush1.msra.mxu0 0.0
        %874 = vmatprep.subr.mxu0 0.0
        %875 = vmatpush1.msra.mxu0 0.0
        %876 = vmatprep.subr.mxu0 0.0
        %877 = vmatpush1.msra.mxu0 0.0
        %878 = vmatprep.subr.mxu0 0.0
        %879 = vmatpush1.msra.mxu0 0.0
        %880 = vmatprep.subr.mxu0 0.0
        %881 = vmatpush1.msra.mxu0 0.0
        %882 = vmatprep.subr.mxu0 0.0
        %883 = vmatpush1.msra.mxu0 0.0
        %884 = vmatprep.subr.mxu0 0.0
        %885 = vmatpush1.msra.mxu0 0.0
        %886 = vmatprep.subr.mxu0 0.0
        %887 = vmatpush1.msra.mxu0 0.0
        %888 = vmatprep.subr.mxu0 0.0
        %889 = vmatpush1.msra.mxu0 0.0
        %890 = vmatprep.subr.mxu0 0.0
        %891 = vmatpush1.msra.mxu0 0.0
        %892 = vmatprep.subr.mxu0 0.0
        %893 = vmatpush1.msra.mxu0 0.0
        %894 = vmatprep.subr.mxu0 0.0
        %895 = vmatpush1.msra.mxu0 0.0
        %896 = vmatprep.subr.mxu0 0.0
        %897 = vmatpush1.msra.mxu0 0.0
        %898 = vmatprep.subr.mxu0 0.0
        %899 = vmatpush1.msra.mxu0 0.0
        %900 = vmatprep.subr.mxu0 0.0
        %901 = vmatpush1.msra.mxu0 0.0
        %902 = vmatprep.subr.mxu0 0.0
        %903 = vmatpush1.msra.mxu0 0.0
        %904 = vmatprep.mubr.f32.mxu0 0.0
        %905 = vmatmul.mubr.f32.gmra.mrb[0].mxu0 %v832
        %v906 = vpop.f32.mrb[0].mxu0
        %v907 = vadd.f32 0.0, %v906
        %v908 = vpop.f32.mrb[0].mxu0
        %v909 = vadd.f32 0.0, %v908
        %910 = vdwg.mxu0
        %911 = vmatprep.subr.mxu0 0.0
        %912 = vmatpush1.msra.mxu0 %v838
        %913 = vmatprep.subr.mxu0 0.0
        %914 = vmatpush1.msra.mxu0 0.0
        %915 = vmatprep.subr.mxu0 0.0
        %916 = vmatpush1.msra.mxu0 0.0
        %917 = vmatprep.subr.mxu0 0.0
        %918 = vmatpush1.msra.mxu0 0.0
        %919 = vmatprep.subr.mxu0 0.0
        %920 = vmatpush1.msra.mxu0 0.0
        %921 = vmatprep.subr.mxu0 0.0
        %922 = vmatpush1.msra.mxu0 0.0
        %923 = vmatprep.subr.mxu0 0.0
        %924 = vmatpush1.msra.mxu0 0.0
        %925 = vmatprep.subr.mxu0 0.0
        %926 = vmatpush1.msra.mxu0 0.0
        %927 = vmatprep.subr.mxu0 0.0
        %928 = vmatpush1.msra.mxu0 0.0
        %929 = vmatprep.subr.mxu0 0.0
        %930 = vmatpush1.msra.mxu0 0.0
        %931 = vmatprep.subr.mxu0 0.0
        %932 = vmatpush1.msra.mxu0 0.0
        %933 = vmatprep.subr.mxu0 0.0
        %934 = vmatpush1.msra.mxu0 0.0
        %935 = vmatprep.subr.mxu0 0.0
        %936 = vmatpush1.msra.mxu0 0.0
        %937 = vmatprep.subr.mxu0 0.0
        %938 = vmatpush1.msra.mxu0 0.0
        %939 = vmatprep.subr.mxu0 0.0
        %940 = vmatpush1.msra.mxu0 0.0
        %941 = vmatprep.subr.mxu0 0.0
        %942 = vmatpush1.msra.mxu0 0.0
        %943 = vmatprep.subr.mxu0 0.0
        %944 = vmatpush1.msra.mxu0 0.0
        %945 = vmatprep.subr.mxu0 0.0
        %946 = vmatpush1.msra.mxu0 0.0
        %947 = vmatprep.subr.mxu0 0.0
        %948 = vmatpush1.msra.mxu0 0.0
        %949 = vmatprep.subr.mxu0 0.0
        %950 = vmatpush1.msra.mxu0 0.0
        %951 = vmatprep.subr.mxu0 0.0
        %952 = vmatpush1.msra.mxu0 0.0
        %953 = vmatprep.subr.mxu0 0.0
        %954 = vmatpush1.msra.mxu0 0.0
        %955 = vmatprep.subr.mxu0 0.0
        %956 = vmatpush1.msra.mxu0 0.0
        %957 = vmatprep.subr.mxu0 0.0
        %958 = vmatpush1.msra.mxu0 0.0
        %959 = vmatprep.subr.mxu0 0.0
        %960 = vmatpush1.msra.mxu0 0.0
        %961 = vmatprep.subr.mxu0 0.0
        %962 = vmatpush1.msra.mxu0 0.0
        %963 = vmatprep.subr.mxu0 0.0
        %964 = vmatpush1.msra.mxu0 0.0
        %965 = vmatprep.subr.mxu0 0.0
        %966 = vmatpush1.msra.mxu0 0.0
        %967 = vmatprep.subr.mxu0 0.0
        %968 = vmatpush1.msra.mxu0 0.0
        %969 = vmatprep.subr.mxu0 0.0
        %970 = vmatpush1.msra.mxu0 0.0
        %971 = vmatprep.subr.mxu0 0.0
        %972 = vmatpush1.msra.mxu0 0.0
        %973 = vmatprep.subr.mxu0 0.0
        %974 = vmatpush1.msra.mxu0 0.0
        %975 = vmatprep.mubr.f32.mxu0 0.0
        %976 = vmatmul.mubr.f32.gmra.mrb[0].mxu0 %v832
        %v977 = vpop.f32.mrb[0].mxu0
        %v978 = vadd.f32 0.0, %v977
        %v979 = vpop.f32.mrb[0].mxu0
        %980 = vdwg.mxu0
        %v981 = vadd.f32 %v808, %v907
        %v982 = vadd.f32 %v809, %v909
        %v983 = vadd.f32 %v810, %v978
        %s984 = scalar_lea.vmem %s2, 32
        %v985 = vld [vmem:[%s984] sm:$0xff]
        %v986 = vld [vmem:[#allocation2] sm:$0xff]
        %v987 = vld [vmem:[#allocation2 + $0x8] sm:$0xff]
        %v990 = vcombine.high %v986, %v986
        %v991 = vcombine.high %v987, %v987
        %992 = vrot.lane.b32.xlu0 %v986, 109
        %v993 = vpop.permute.xlu0 %992
        %994 = vrot.lane.b32.xlu0 %v990, 109
        %v995 = vpop.permute.xlu0 %994
        %996 = vrot.lane.b32.xlu0 %v987, 109
        %v997 = vpop.permute.xlu0 %996
        %998 = vrot.lane.b32.xlu0 %v991, 109
        %v999 = vpop.permute.xlu0 %998
        %vm1000 = vcmask 891904
        %v1001 = vsel %vm1000, %v993, %v995
        %v1002 = vsel %vm1000, %v995, %v997
        %v1003 = vsel %vm1000, %v997, %v999
        %v1005 = vsel %vm310, %v985, 0
        %v1007 = vsel %vm314, %v1001, 0
        %v1009 = vsel %vm314, %v1002, 0
        %v1011 = vsel %vm314, %v1003, 0
        %1013 = vmatprep.subr.mxu0 %v1009
        %1014 = vmatpush1.msra.mxu0 %v1007
        %1015 = vmatprep.subr.mxu0 0.0
        %1016 = vmatpush1.msra.mxu0 0.0
        %1017 = vmatprep.subr.mxu0 0.0
        %1018 = vmatpush1.msra.mxu0 0.0
        %1019 = vmatprep.subr.mxu0 0.0
        %1020 = vmatpush1.msra.mxu0 0.0
        %1021 = vmatprep.subr.mxu0 0.0
        %1022 = vmatpush1.msra.mxu0 0.0
        %1023 = vmatprep.subr.mxu0 0.0
        %1024 = vmatpush1.msra.mxu0 0.0
        %1025 = vmatprep.subr.mxu0 0.0
        %1026 = vmatpush1.msra.mxu0 0.0
        %1027 = vmatprep.subr.mxu0 0.0
        %1028 = vmatpush1.msra.mxu0 0.0
        %1029 = vmatprep.subr.mxu0 0.0
        %1030 = vmatpush1.msra.mxu0 0.0
        %1031 = vmatprep.subr.mxu0 0.0
        %1032 = vmatpush1.msra.mxu0 0.0
        %1033 = vmatprep.subr.mxu0 0.0
        %1034 = vmatpush1.msra.mxu0 0.0
        %1035 = vmatprep.subr.mxu0 0.0
        %1036 = vmatpush1.msra.mxu0 0.0
        %1037 = vmatprep.subr.mxu0 0.0
        %1038 = vmatpush1.msra.mxu0 0.0
        %1039 = vmatprep.subr.mxu0 0.0
        %1040 = vmatpush1.msra.mxu0 0.0
        %1041 = vmatprep.subr.mxu0 0.0
        %1042 = vmatpush1.msra.mxu0 0.0
        %1043 = vmatprep.subr.mxu0 0.0
        %1044 = vmatpush1.msra.mxu0 0.0
        %1045 = vmatprep.subr.mxu0 0.0
        %1046 = vmatpush1.msra.mxu0 0.0
        %1047 = vmatprep.subr.mxu0 0.0
        %1048 = vmatpush1.msra.mxu0 0.0
        %1049 = vmatprep.subr.mxu0 0.0
        %1050 = vmatpush1.msra.mxu0 0.0
        %1051 = vmatprep.subr.mxu0 0.0
        %1052 = vmatpush1.msra.mxu0 0.0
        %1053 = vmatprep.subr.mxu0 0.0
        %1054 = vmatpush1.msra.mxu0 0.0
        %1055 = vmatprep.subr.mxu0 0.0
        %1056 = vmatpush1.msra.mxu0 0.0
        %1057 = vmatprep.subr.mxu0 0.0
        %1058 = vmatpush1.msra.mxu0 0.0
        %1059 = vmatprep.subr.mxu0 0.0
        %1060 = vmatpush1.msra.mxu0 0.0
        %1061 = vmatprep.subr.mxu0 0.0
        %1062 = vmatpush1.msra.mxu0 0.0
        %1063 = vmatprep.subr.mxu0 0.0
        %1064 = vmatpush1.msra.mxu0 0.0
        %1065 = vmatprep.subr.mxu0 0.0
        %1066 = vmatpush1.msra.mxu0 0.0
        %1067 = vmatprep.subr.mxu0 0.0
        %1068 = vmatpush1.msra.mxu0 0.0
        %1069 = vmatprep.subr.mxu0 0.0
        %1070 = vmatpush1.msra.mxu0 0.0
        %1071 = vmatprep.subr.mxu0 0.0
        %1072 = vmatpush1.msra.mxu0 0.0
        %1073 = vmatprep.subr.mxu0 0.0
        %1074 = vmatpush1.msra.mxu0 0.0
        %1075 = vmatprep.subr.mxu0 0.0
        %1076 = vmatpush1.msra.mxu0 0.0
        %1077 = vmatprep.mubr.f32.mxu0 0.0
        %1078 = vmatmul.mubr.f32.gmra.mrb[0].mxu0 %v1005
        %v1079 = vpop.f32.mrb[0].mxu0
        %v1080 = vadd.f32 0.0, %v1079
        %v1081 = vpop.f32.mrb[0].mxu0
        %v1082 = vadd.f32 0.0, %v1081
        %1083 = vdwg.mxu0
        %1084 = vmatprep.subr.mxu0 0.0
        %1085 = vmatpush1.msra.mxu0 %v1011
        %1086 = vmatprep.subr.mxu0 0.0
        %1087 = vmatpush1.msra.mxu0 0.0
        %1088 = vmatprep.subr.mxu0 0.0
        %1089 = vmatpush1.msra.mxu0 0.0
        %1090 = vmatprep.subr.mxu0 0.0
        %1091 = vmatpush1.msra.mxu0 0.0
        %1092 = vmatprep.subr.mxu0 0.0
        %1093 = vmatpush1.msra.mxu0 0.0
        %1094 = vmatprep.subr.mxu0 0.0
        %1095 = vmatpush1.msra.mxu0 0.0
        %1096 = vmatprep.subr.mxu0 0.0
        %1097 = vmatpush1.msra.mxu0 0.0
        %1098 = vmatprep.subr.mxu0 0.0
        %1099 = vmatpush1.msra.mxu0 0.0
        %1100 = vmatprep.subr.mxu0 0.0
        %1101 = vmatpush1.msra.mxu0 0.0
        %1102 = vmatprep.subr.mxu0 0.0
        %1103 = vmatpush1.msra.mxu0 0.0
        %1104 = vmatprep.subr.mxu0 0.0
        %1105 = vmatpush1.msra.mxu0 0.0
        %1106 = vmatprep.subr.mxu0 0.0
        %1107 = vmatpush1.msra.mxu0 0.0
        %1108 = vmatprep.subr.mxu0 0.0
        %1109 = vmatpush1.msra.mxu0 0.0
        %1110 = vmatprep.subr.mxu0 0.0
        %1111 = vmatpush1.msra.mxu0 0.0
        %1112 = vmatprep.subr.mxu0 0.0
        %1113 = vmatpush1.msra.mxu0 0.0
        %1114 = vmatprep.subr.mxu0 0.0
        %1115 = vmatpush1.msra.mxu0 0.0
        %1116 = vmatprep.subr.mxu0 0.0
        %1117 = vmatpush1.msra.mxu0 0.0
        %1118 = vmatprep.subr.mxu0 0.0
        %1119 = vmatpush1.msra.mxu0 0.0
        %1120 = vmatprep.subr.mxu0 0.0
        %1121 = vmatpush1.msra.mxu0 0.0
        %1122 = vmatprep.subr.mxu0 0.0
        %1123 = vmatpush1.msra.mxu0 0.0
        %1124 = vmatprep.subr.mxu0 0.0
        %1125 = vmatpush1.msra.mxu0 0.0
        %1126 = vmatprep.subr.mxu0 0.0
        %1127 = vmatpush1.msra.mxu0 0.0
        %1128 = vmatprep.subr.mxu0 0.0
        %1129 = vmatpush1.msra.mxu0 0.0
        %1130 = vmatprep.subr.mxu0 0.0
        %1131 = vmatpush1.msra.mxu0 0.0
        %1132 = vmatprep.subr.mxu0 0.0
        %1133 = vmatpush1.msra.mxu0 0.0
        %1134 = vmatprep.subr.mxu0 0.0
        %1135 = vmatpush1.msra.mxu0 0.0
        %1136 = vmatprep.subr.mxu0 0.0
        %1137 = vmatpush1.msra.mxu0 0.0
        %1138 = vmatprep.subr.mxu0 0.0
        %1139 = vmatpush1.msra.mxu0 0.0
        %1140 = vmatprep.subr.mxu0 0.0
        %1141 = vmatpush1.msra.mxu0 0.0
        %1142 = vmatprep.subr.mxu0 0.0
        %1143 = vmatpush1.msra.mxu0 0.0
        %1144 = vmatprep.subr.mxu0 0.0
        %1145 = vmatpush1.msra.mxu0 0.0
        %1146 = vmatprep.subr.mxu0 0.0
        %1147 = vmatpush1.msra.mxu0 0.0
        %1148 = vmatprep.mubr.f32.mxu0 0.0
        %1149 = vmatmul.mubr.f32.gmra.mrb[0].mxu0 %v1005
        %v1150 = vpop.f32.mrb[0].mxu0
        %v1151 = vadd.f32 0.0, %v1150
        %v1152 = vpop.f32.mrb[0].mxu0
        %1153 = vdwg.mxu0
        %v1154 = vadd.f32 %v981, %v1080
        %v1155 = vadd.f32 %v982, %v1082
        %v1156 = vadd.f32 %v983, %v1151
        %s1157 = scalar_lea.vmem %s2, 40
        %v1158 = vld [vmem:[%s1157] sm:$0xff]
        %v1159 = vld [vmem:[#allocation2] sm:$0xff]
        %v1160 = vld [vmem:[#allocation2 + $0x8] sm:$0xff]
        %v1163 = vcombine.high %v1159, %v1159
        %v1164 = vcombine.high %v1160, %v1160
        %1165 = vrot.lane.b32.xlu0 %v1159, 108
        %v1166 = vpop.permute.xlu0 %1165
        %1167 = vrot.lane.b32.xlu0 %v1163, 108
        %v1168 = vpop.permute.xlu0 %1167
        %1169 = vrot.lane.b32.xlu0 %v1160, 108
        %v1170 = vpop.permute.xlu0 %1169
        %1171 = vrot.lane.b32.xlu0 %v1164, 108
        %v1172 = vpop.permute.xlu0 %1171
        %vm1173 = vcmask 883712
        %v1174 = vsel %vm1173, %v1166, %v1168
        %v1175 = vsel %vm1173, %v1168, %v1170
        %v1176 = vsel %vm1173, %v1170, %v1172
        %v1178 = vsel %vm310, %v1158, 0
        %v1180 = vsel %vm314, %v1174, 0
        %v1182 = vsel %vm314, %v1175, 0
        %v1184 = vsel %vm314, %v1176, 0
        %1186 = vmatprep.subr.mxu0 %v1182
        %1187 = vmatpush1.msra.mxu0 %v1180
        %1188 = vmatprep.subr.mxu0 0.0
        %1189 = vmatpush1.msra.mxu0 0.0
        %1190 = vmatprep.subr.mxu0 0.0
        %1191 = vmatpush1.msra.mxu0 0.0
        %1192 = vmatprep.subr.mxu0 0.0
        %1193 = vmatpush1.msra.mxu0 0.0
        %1194 = vmatprep.subr.mxu0 0.0
        %1195 = vmatpush1.msra.mxu0 0.0
        %1196 = vmatprep.subr.mxu0 0.0
        %1197 = vmatpush1.msra.mxu0 0.0
        %1198 = vmatprep.subr.mxu0 0.0
        %1199 = vmatpush1.msra.mxu0 0.0
        %1200 = vmatprep.subr.mxu0 0.0
        %1201 = vmatpush1.msra.mxu0 0.0
        %1202 = vmatprep.subr.mxu0 0.0
        %1203 = vmatpush1.msra.mxu0 0.0
        %1204 = vmatprep.subr.mxu0 0.0
        %1205 = vmatpush1.msra.mxu0 0.0
        %1206 = vmatprep.subr.mxu0 0.0
        %1207 = vmatpush1.msra.mxu0 0.0
        %1208 = vmatprep.subr.mxu0 0.0
        %1209 = vmatpush1.msra.mxu0 0.0
        %1210 = vmatprep.subr.mxu0 0.0
        %1211 = vmatpush1.msra.mxu0 0.0
        %1212 = vmatprep.subr.mxu0 0.0
        %1213 = vmatpush1.msra.mxu0 0.0
        %1214 = vmatprep.subr.mxu0 0.0
        %1215 = vmatpush1.msra.mxu0 0.0
        %1216 = vmatprep.subr.mxu0 0.0
        %1217 = vmatpush1.msra.mxu0 0.0
        %1218 = vmatprep.subr.mxu0 0.0
        %1219 = vmatpush1.msra.mxu0 0.0
        %1220 = vmatprep.subr.mxu0 0.0
        %1221 = vmatpush1.msra.mxu0 0.0
        %1222 = vmatprep.subr.mxu0 0.0
        %1223 = vmatpush1.msra.mxu0 0.0
        %1224 = vmatprep.subr.mxu0 0.0
        %1225 = vmatpush1.msra.mxu0 0.0
        %1226 = vmatprep.subr.mxu0 0.0
        %1227 = vmatpush1.msra.mxu0 0.0
        %1228 = vmatprep.subr.mxu0 0.0
        %1229 = vmatpush1.msra.mxu0 0.0
        %1230 = vmatprep.subr.mxu0 0.0
        %1231 = vmatpush1.msra.mxu0 0.0
        %1232 = vmatprep.subr.mxu0 0.0
        %1233 = vmatpush1.msra.mxu0 0.0
        %1234 = vmatprep.subr.mxu0 0.0
        %1235 = vmatpush1.msra.mxu0 0.0
        %1236 = vmatprep.subr.mxu0 0.0
        %1237 = vmatpush1.msra.mxu0 0.0
        %1238 = vmatprep.subr.mxu0 0.0
        %1239 = vmatpush1.msra.mxu0 0.0
        %1240 = vmatprep.subr.mxu0 0.0
        %1241 = vmatpush1.msra.mxu0 0.0
        %1242 = vmatprep.subr.mxu0 0.0
        %1243 = vmatpush1.msra.mxu0 0.0
        %1244 = vmatprep.subr.mxu0 0.0
        %1245 = vmatpush1.msra.mxu0 0.0
        %1246 = vmatprep.subr.mxu0 0.0
        %1247 = vmatpush1.msra.mxu0 0.0
        %1248 = vmatprep.subr.mxu0 0.0
        %1249 = vmatpush1.msra.mxu0 0.0
        %1250 = vmatprep.mubr.f32.mxu0 0.0
        %1251 = vmatmul.mubr.f32.gmra.mrb[0].mxu0 %v1178
        %v1252 = vpop.f32.mrb[0].mxu0
        %v1253 = vadd.f32 0.0, %v1252
        %v1254 = vpop.f32.mrb[0].mxu0
        %v1255 = vadd.f32 0.0, %v1254
        %1256 = vdwg.mxu0
        %1257 = vmatprep.subr.mxu0 0.0
        %1258 = vmatpush1.msra.mxu0 %v1184
        %1259 = vmatprep.subr.mxu0 0.0
        %1260 = vmatpush1.msra.mxu0 0.0
        %1261 = vmatprep.subr.mxu0 0.0
        %1262 = vmatpush1.msra.mxu0 0.0
        %1263 = vmatprep.subr.mxu0 0.0
        %1264 = vmatpush1.msra.mxu0 0.0
        %1265 = vmatprep.subr.mxu0 0.0
        %1266 = vmatpush1.msra.mxu0 0.0
        %1267 = vmatprep.subr.mxu0 0.0
        %1268 = vmatpush1.msra.mxu0 0.0
        %1269 = vmatprep.subr.mxu0 0.0
        %1270 = vmatpush1.msra.mxu0 0.0
        %1271 = vmatprep.subr.mxu0 0.0
        %1272 = vmatpush1.msra.mxu0 0.0
        %1273 = vmatprep.subr.mxu0 0.0
        %1274 = vmatpush1.msra.mxu0 0.0
        %1275 = vmatprep.subr.mxu0 0.0
        %1276 = vmatpush1.msra.mxu0 0.0
        %1277 = vmatprep.subr.mxu0 0.0
        %1278 = vmatpush1.msra.mxu0 0.0
        %1279 = vmatprep.subr.mxu0 0.0
        %1280 = vmatpush1.msra.mxu0 0.0
        %1281 = vmatprep.subr.mxu0 0.0
        %1282 = vmatpush1.msra.mxu0 0.0
        %1283 = vmatprep.subr.mxu0 0.0
        %1284 = vmatpush1.msra.mxu0 0.0
        %1285 = vmatprep.subr.mxu0 0.0
        %1286 = vmatpush1.msra.mxu0 0.0
        %1287 = vmatprep.subr.mxu0 0.0
        %1288 = vmatpush1.msra.mxu0 0.0
        %1289 = vmatprep.subr.mxu0 0.0
        %1290 = vmatpush1.msra.mxu0 0.0
        %1291 = vmatprep.subr.mxu0 0.0
        %1292 = vmatpush1.msra.mxu0 0.0
        %1293 = vmatprep.subr.mxu0 0.0
        %1294 = vmatpush1.msra.mxu0 0.0
        %1295 = vmatprep.subr.mxu0 0.0
        %1296 = vmatpush1.msra.mxu0 0.0
        %1297 = vmatprep.subr.mxu0 0.0
        %1298 = vmatpush1.msra.mxu0 0.0
        %1299 = vmatprep.subr.mxu0 0.0
        %1300 = vmatpush1.msra.mxu0 0.0
        %1301 = vmatprep.subr.mxu0 0.0
        %1302 = vmatpush1.msra.mxu0 0.0
        %1303 = vmatprep.subr.mxu0 0.0
        %1304 = vmatpush1.msra.mxu0 0.0
        %1305 = vmatprep.subr.mxu0 0.0
        %1306 = vmatpush1.msra.mxu0 0.0
        %1307 = vmatprep.subr.mxu0 0.0
        %1308 = vmatpush1.msra.mxu0 0.0
        %1309 = vmatprep.subr.mxu0 0.0
        %1310 = vmatpush1.msra.mxu0 0.0
        %1311 = vmatprep.subr.mxu0 0.0
        %1312 = vmatpush1.msra.mxu0 0.0
        %1313 = vmatprep.subr.mxu0 0.0
        %1314 = vmatpush1.msra.mxu0 0.0
        %1315 = vmatprep.subr.mxu0 0.0
        %1316 = vmatpush1.msra.mxu0 0.0
        %1317 = vmatprep.subr.mxu0 0.0
        %1318 = vmatpush1.msra.mxu0 0.0
        %1319 = vmatprep.subr.mxu0 0.0
        %1320 = vmatpush1.msra.mxu0 0.0
        %1321 = vmatprep.mubr.f32.mxu0 0.0
        %1322 = vmatmul.mubr.f32.gmra.mrb[0].mxu0 %v1178
        %v1323 = vpop.f32.mrb[0].mxu0
        %v1324 = vadd.f32 0.0, %v1323
        %v1325 = vpop.f32.mrb[0].mxu0
        %1326 = vdwg.mxu0
        %v1327 = vadd.f32 %v1154, %v1253
        %v1328 = vadd.f32 %v1155, %v1255
        %v1329 = vadd.f32 %v1156, %v1324
        %s1330 = scalar_lea.vmem %s2, 48
        %v1331 = vld [vmem:[%s1330] sm:$0xff]
        %v1332 = vld [vmem:[#allocation2] sm:$0xff]
        %v1333 = vld [vmem:[#allocation2 + $0x8] sm:$0xff]
        %v1336 = vcombine.high %v1332, %v1332
        %v1337 = vcombine.high %v1333, %v1333
        %1338 = vrot.lane.b32.xlu0 %v1332, 92
        %v1339 = vpop.permute.xlu0 %1338
        %1340 = vrot.lane.b32.xlu0 %v1336, 92
        %v1341 = vpop.permute.xlu0 %1340
        %1342 = vrot.lane.b32.xlu0 %v1333, 92
        %v1343 = vpop.permute.xlu0 %1342
        %1344 = vrot.lane.b32.xlu0 %v1337, 92
        %v1345 = vpop.permute.xlu0 %1344
        %vm1346 = vcmask 752640
        %v1347 = vsel %vm1346, %v1339, %v1341
        %v1348 = vsel %vm1346, %v1341, %v1343
        %v1349 = vsel %vm1346, %v1343, %v1345
        %v1351 = vsel %vm310, %v1331, 0
        %v1353 = vsel %vm314, %v1347, 0
        %v1355 = vsel %vm314, %v1348, 0
        %v1357 = vsel %vm314, %v1349, 0
        %1359 = vmatprep.subr.mxu0 %v1355
        %1360 = vmatpush1.msra.mxu0 %v1353
        %1361 = vmatprep.subr.mxu0 0.0
        %1362 = vmatpush1.msra.mxu0 0.0
        %1363 = vmatprep.subr.mxu0 0.0
        %1364 = vmatpush1.msra.mxu0 0.0
        %1365 = vmatprep.subr.mxu0 0.0
        %1366 = vmatpush1.msra.mxu0 0.0
        %1367 = vmatprep.subr.mxu0 0.0
        %1368 = vmatpush1.msra.mxu0 0.0
        %1369 = vmatprep.subr.mxu0 0.0
        %1370 = vmatpush1.msra.mxu0 0.0
        %1371 = vmatprep.subr.mxu0 0.0
        %1372 = vmatpush1.msra.mxu0 0.0
        %1373 = vmatprep.subr.mxu0 0.0
        %1374 = vmatpush1.msra.mxu0 0.0
        %1375 = vmatprep.subr.mxu0 0.0
        %1376 = vmatpush1.msra.mxu0 0.0
        %1377 = vmatprep.subr.mxu0 0.0
        %1378 = vmatpush1.msra.mxu0 0.0
        %1379 = vmatprep.subr.mxu0 0.0
        %1380 = vmatpush1.msra.mxu0 0.0
        %1381 = vmatprep.subr.mxu0 0.0
        %1382 = vmatpush1.msra.mxu0 0.0
        %1383 = vmatprep.subr.mxu0 0.0
        %1384 = vmatpush1.msra.mxu0 0.0
        %1385 = vmatprep.subr.mxu0 0.0
        %1386 = vmatpush1.msra.mxu0 0.0
        %1387 = vmatprep.subr.mxu0 0.0
        %1388 = vmatpush1.msra.mxu0 0.0
        %1389 = vmatprep.subr.mxu0 0.0
        %1390 = vmatpush1.msra.mxu0 0.0
        %1391 = vmatprep.subr.mxu0 0.0
        %1392 = vmatpush1.msra.mxu0 0.0
        %1393 = vmatprep.subr.mxu0 0.0
        %1394 = vmatpush1.msra.mxu0 0.0
        %1395 = vmatprep.subr.mxu0 0.0
        %1396 = vmatpush1.msra.mxu0 0.0
        %1397 = vmatprep.subr.mxu0 0.0
        %1398 = vmatpush1.msra.mxu0 0.0
        %1399 = vmatprep.subr.mxu0 0.0
        %1400 = vmatpush1.msra.mxu0 0.0
        %1401 = vmatprep.subr.mxu0 0.0
        %1402 = vmatpush1.msra.mxu0 0.0
        %1403 = vmatprep.subr.mxu0 0.0
        %1404 = vmatpush1.msra.mxu0 0.0
        %1405 = vmatprep.subr.mxu0 0.0
        %1406 = vmatpush1.msra.mxu0 0.0
        %1407 = vmatprep.subr.mxu0 0.0
        %1408 = vmatpush1.msra.mxu0 0.0
        %1409 = vmatprep.subr.mxu0 0.0
        %1410 = vmatpush1.msra.mxu0 0.0
        %1411 = vmatprep.subr.mxu0 0.0
        %1412 = vmatpush1.msra.mxu0 0.0
        %1413 = vmatprep.subr.mxu0 0.0
        %1414 = vmatpush1.msra.mxu0 0.0
        %1415 = vmatprep.subr.mxu0 0.0
        %1416 = vmatpush1.msra.mxu0 0.0
        %1417 = vmatprep.subr.mxu0 0.0
        %1418 = vmatpush1.msra.mxu0 0.0
        %1419 = vmatprep.subr.mxu0 0.0
        %1420 = vmatpush1.msra.mxu0 0.0
        %1421 = vmatprep.subr.mxu0 0.0
        %1422 = vmatpush1.msra.mxu0 0.0
        %1423 = vmatprep.mubr.f32.mxu0 0.0
        %1424 = vmatmul.mubr.f32.gmra.mrb[0].mxu0 %v1351
        %v1425 = vpop.f32.mrb[0].mxu0
        %v1426 = vadd.f32 0.0, %v1425
        %v1427 = vpop.f32.mrb[0].mxu0
        %v1428 = vadd.f32 0.0, %v1427
        %1429 = vdwg.mxu0
        %1430 = vmatprep.subr.mxu0 0.0
        %1431 = vmatpush1.msra.mxu0 %v1357
        %1432 = vmatprep.subr.mxu0 0.0
        %1433 = vmatpush1.msra.mxu0 0.0
        %1434 = vmatprep.subr.mxu0 0.0
        %1435 = vmatpush1.msra.mxu0 0.0
        %1436 = vmatprep.subr.mxu0 0.0
        %1437 = vmatpush1.msra.mxu0 0.0
        %1438 = vmatprep.subr.mxu0 0.0
        %1439 = vmatpush1.msra.mxu0 0.0
        %1440 = vmatprep.subr.mxu0 0.0
        %1441 = vmatpush1.msra.mxu0 0.0
        %1442 = vmatprep.subr.mxu0 0.0
        %1443 = vmatpush1.msra.mxu0 0.0
        %1444 = vmatprep.subr.mxu0 0.0
        %1445 = vmatpush1.msra.mxu0 0.0
        %1446 = vmatprep.subr.mxu0 0.0
        %1447 = vmatpush1.msra.mxu0 0.0
        %1448 = vmatprep.subr.mxu0 0.0
        %1449 = vmatpush1.msra.mxu0 0.0
        %1450 = vmatprep.subr.mxu0 0.0
        %1451 = vmatpush1.msra.mxu0 0.0
        %1452 = vmatprep.subr.mxu0 0.0
        %1453 = vmatpush1.msra.mxu0 0.0
        %1454 = vmatprep.subr.mxu0 0.0
        %1455 = vmatpush1.msra.mxu0 0.0
        %1456 = vmatprep.subr.mxu0 0.0
        %1457 = vmatpush1.msra.mxu0 0.0
        %1458 = vmatprep.subr.mxu0 0.0
        %1459 = vmatpush1.msra.mxu0 0.0
        %1460 = vmatprep.subr.mxu0 0.0
        %1461 = vmatpush1.msra.mxu0 0.0
        %1462 = vmatprep.subr.mxu0 0.0
        %1463 = vmatpush1.msra.mxu0 0.0
        %1464 = vmatprep.subr.mxu0 0.0
        %1465 = vmatpush1.msra.mxu0 0.0
        %1466 = vmatprep.subr.mxu0 0.0
        %1467 = vmatpush1.msra.mxu0 0.0
        %1468 = vmatprep.subr.mxu0 0.0
        %1469 = vmatpush1.msra.mxu0 0.0
        %1470 = vmatprep.subr.mxu0 0.0
        %1471 = vmatpush1.msra.mxu0 0.0
        %1472 = vmatprep.subr.mxu0 0.0
        %1473 = vmatpush1.msra.mxu0 0.0
        %1474 = vmatprep.subr.mxu0 0.0
        %1475 = vmatpush1.msra.mxu0 0.0
        %1476 = vmatprep.subr.mxu0 0.0
        %1477 = vmatpush1.msra.mxu0 0.0
        %1478 = vmatprep.subr.mxu0 0.0
        %1479 = vmatpush1.msra.mxu0 0.0
        %1480 = vmatprep.subr.mxu0 0.0
        %1481 = vmatpush1.msra.mxu0 0.0
        %1482 = vmatprep.subr.mxu0 0.0
        %1483 = vmatpush1.msra.mxu0 0.0
        %1484 = vmatprep.subr.mxu0 0.0
        %1485 = vmatpush1.msra.mxu0 0.0
        %1486 = vmatprep.subr.mxu0 0.0
        %1487 = vmatpush1.msra.mxu0 0.0
        %1488 = vmatprep.subr.mxu0 0.0
        %1489 = vmatpush1.msra.mxu0 0.0
        %1490 = vmatprep.subr.mxu0 0.0
        %1491 = vmatpush1.msra.mxu0 0.0
        %1492 = vmatprep.subr.mxu0 0.0
        %1493 = vmatpush1.msra.mxu0 0.0
        %1494 = vmatprep.mubr.f32.mxu0 0.0
        %1495 = vmatmul.mubr.f32.gmra.mrb[0].mxu0 %v1351
        %v1496 = vpop.f32.mrb[0].mxu0
        %v1497 = vadd.f32 0.0, %v1496
        %v1498 = vpop.f32.mrb[0].mxu0
        %1499 = vdwg.mxu0
        %v1500 = vadd.f32 %v1327, %v1426
        %v1501 = vadd.f32 %v1328, %v1428
        %v1502 = vadd.f32 %v1329, %v1497
        %s1503 = scalar_lea.vmem %s2, 56
        %v1504 = vld [vmem:[%s1503] sm:$0xff]
        %v1505 = vld [vmem:[#allocation2] sm:$0xff]
        %v1506 = vld [vmem:[#allocation2 + $0x8] sm:$0xff]
        %v1509 = vcombine.high %v1505, %v1505
        %v1510 = vcombine.high %v1506, %v1506
        %1511 = vrot.lane.b32.xlu0 %v1505, 91
        %v1512 = vpop.permute.xlu0 %1511
        %1513 = vrot.lane.b32.xlu0 %v1509, 91
        %v1514 = vpop.permute.xlu0 %1513
        %1515 = vrot.lane.b32.xlu0 %v1506, 91
        %v1516 = vpop.permute.xlu0 %1515
        %1517 = vrot.lane.b32.xlu0 %v1510, 91
        %v1518 = vpop.permute.xlu0 %1517
        %vm1519 = vcmask 744448
        %v1520 = vsel %vm1519, %v1512, %v1514
        %v1521 = vsel %vm1519, %v1514, %v1516
        %v1522 = vsel %vm1519, %v1516, %v1518
        %v1524 = vsel %vm310, %v1504, 0
        %v1526 = vsel %vm314, %v1520, 0
        %v1528 = vsel %vm314, %v1521, 0
        %v1530 = vsel %vm314, %v1522, 0
        %1532 = vmatprep.subr.mxu0 %v1528
        %1533 = vmatpush1.msra.mxu0 %v1526
        %1534 = vmatprep.subr.mxu0 0.0
        %1535 = vmatpush1.msra.mxu0 0.0
        %1536 = vmatprep.subr.mxu0 0.0
        %1537 = vmatpush1.msra.mxu0 0.0
        %1538 = vmatprep.subr.mxu0 0.0
        %1539 = vmatpush1.msra.mxu0 0.0
        %1540 = vmatprep.subr.mxu0 0.0
        %1541 = vmatpush1.msra.mxu0 0.0
        %1542 = vmatprep.subr.mxu0 0.0
        %1543 = vmatpush1.msra.mxu0 0.0
        %1544 = vmatprep.subr.mxu0 0.0
        %1545 = vmatpush1.msra.mxu0 0.0
        %1546 = vmatprep.subr.mxu0 0.0
        %1547 = vmatpush1.msra.mxu0 0.0
        %1548 = vmatprep.subr.mxu0 0.0
        %1549 = vmatpush1.msra.mxu0 0.0
        %1550 = vmatprep.subr.mxu0 0.0
        %1551 = vmatpush1.msra.mxu0 0.0
        %1552 = vmatprep.subr.mxu0 0.0
        %1553 = vmatpush1.msra.mxu0 0.0
        %1554 = vmatprep.subr.mxu0 0.0
        %1555 = vmatpush1.msra.mxu0 0.0
        %1556 = vmatprep.subr.mxu0 0.0
        %1557 = vmatpush1.msra.mxu0 0.0
        %1558 = vmatprep.subr.mxu0 0.0
        %1559 = vmatpush1.msra.mxu0 0.0
        %1560 = vmatprep.subr.mxu0 0.0
        %1561 = vmatpush1.msra.mxu0 0.0
        %1562 = vmatprep.subr.mxu0 0.0
        %1563 = vmatpush1.msra.mxu0 0.0
        %1564 = vmatprep.subr.mxu0 0.0
        %1565 = vmatpush1.msra.mxu0 0.0
        %1566 = vmatprep.subr.mxu0 0.0
        %1567 = vmatpush1.msra.mxu0 0.0
        %1568 = vmatprep.subr.mxu0 0.0
        %1569 = vmatpush1.msra.mxu0 0.0
        %1570 = vmatprep.subr.mxu0 0.0
        %1571 = vmatpush1.msra.mxu0 0.0
        %1572 = vmatprep.subr.mxu0 0.0
        %1573 = vmatpush1.msra.mxu0 0.0
        %1574 = vmatprep.subr.mxu0 0.0
        %1575 = vmatpush1.msra.mxu0 0.0
        %1576 = vmatprep.subr.mxu0 0.0
        %1577 = vmatpush1.msra.mxu0 0.0
        %1578 = vmatprep.subr.mxu0 0.0
        %1579 = vmatpush1.msra.mxu0 0.0
        %1580 = vmatprep.subr.mxu0 0.0
        %1581 = vmatpush1.msra.mxu0 0.0
        %1582 = vmatprep.subr.mxu0 0.0
        %1583 = vmatpush1.msra.mxu0 0.0
        %1584 = vmatprep.subr.mxu0 0.0
        %1585 = vmatpush1.msra.mxu0 0.0
        %1586 = vmatprep.subr.mxu0 0.0
        %1587 = vmatpush1.msra.mxu0 0.0
        %1588 = vmatprep.subr.mxu0 0.0
        %1589 = vmatpush1.msra.mxu0 0.0
        %1590 = vmatprep.subr.mxu0 0.0
        %1591 = vmatpush1.msra.mxu0 0.0
        %1592 = vmatprep.subr.mxu0 0.0
        %1593 = vmatpush1.msra.mxu0 0.0
        %1594 = vmatprep.subr.mxu0 0.0
        %1595 = vmatpush1.msra.mxu0 0.0
        %1596 = vmatprep.mubr.f32.mxu0 0.0
        %1597 = vmatmul.mubr.f32.gmra.mrb[0].mxu0 %v1524
        %v1598 = vpop.f32.mrb[0].mxu0
        %v1599 = vadd.f32 0.0, %v1598
        %v1600 = vpop.f32.mrb[0].mxu0
        %v1601 = vadd.f32 0.0, %v1600
        %1602 = vdwg.mxu0
        %1603 = vmatprep.subr.mxu0 0.0
        %1604 = vmatpush1.msra.mxu0 %v1530
        %1605 = vmatprep.subr.mxu0 0.0
        %1606 = vmatpush1.msra.mxu0 0.0
        %1607 = vmatprep.subr.mxu0 0.0
        %1608 = vmatpush1.msra.mxu0 0.0
        %1609 = vmatprep.subr.mxu0 0.0
        %1610 = vmatpush1.msra.mxu0 0.0
        %1611 = vmatprep.subr.mxu0 0.0
        %1612 = vmatpush1.msra.mxu0 0.0
        %1613 = vmatprep.subr.mxu0 0.0
        %1614 = vmatpush1.msra.mxu0 0.0
        %1615 = vmatprep.subr.mxu0 0.0
        %1616 = vmatpush1.msra.mxu0 0.0
        %1617 = vmatprep.subr.mxu0 0.0
        %1618 = vmatpush1.msra.mxu0 0.0
        %1619 = vmatprep.subr.mxu0 0.0
        %1620 = vmatpush1.msra.mxu0 0.0
        %1621 = vmatprep.subr.mxu0 0.0
        %1622 = vmatpush1.msra.mxu0 0.0
        %1623 = vmatprep.subr.mxu0 0.0
        %1624 = vmatpush1.msra.mxu0 0.0
        %1625 = vmatprep.subr.mxu0 0.0
        %1626 = vmatpush1.msra.mxu0 0.0
        %1627 = vmatprep.subr.mxu0 0.0
        %1628 = vmatpush1.msra.mxu0 0.0
        %1629 = vmatprep.subr.mxu0 0.0
        %1630 = vmatpush1.msra.mxu0 0.0
        %1631 = vmatprep.subr.mxu0 0.0
        %1632 = vmatpush1.msra.mxu0 0.0
        %1633 = vmatprep.subr.mxu0 0.0
        %1634 = vmatpush1.msra.mxu0 0.0
        %1635 = vmatprep.subr.mxu0 0.0
        %1636 = vmatpush1.msra.mxu0 0.0
        %1637 = vmatprep.subr.mxu0 0.0
        %1638 = vmatpush1.msra.mxu0 0.0
        %1639 = vmatprep.subr.mxu0 0.0
        %1640 = vmatpush1.msra.mxu0 0.0
        %1641 = vmatprep.subr.mxu0 0.0
        %1642 = vmatpush1.msra.mxu0 0.0
        %1643 = vmatprep.subr.mxu0 0.0
        %1644 = vmatpush1.msra.mxu0 0.0
        %1645 = vmatprep.subr.mxu0 0.0
        %1646 = vmatpush1.msra.mxu0 0.0
        %1647 = vmatprep.subr.mxu0 0.0
        %1648 = vmatpush1.msra.mxu0 0.0
        %1649 = vmatprep.subr.mxu0 0.0
        %1650 = vmatpush1.msra.mxu0 0.0
        %1651 = vmatprep.subr.mxu0 0.0
        %1652 = vmatpush1.msra.mxu0 0.0
        %1653 = vmatprep.subr.mxu0 0.0
        %1654 = vmatpush1.msra.mxu0 0.0
        %1655 = vmatprep.subr.mxu0 0.0
        %1656 = vmatpush1.msra.mxu0 0.0
        %1657 = vmatprep.subr.mxu0 0.0
        %1658 = vmatpush1.msra.mxu0 0.0
        %1659 = vmatprep.subr.mxu0 0.0
        %1660 = vmatpush1.msra.mxu0 0.0
        %1661 = vmatprep.subr.mxu0 0.0
        %1662 = vmatpush1.msra.mxu0 0.0
        %1663 = vmatprep.subr.mxu0 0.0
        %1664 = vmatpush1.msra.mxu0 0.0
        %1665 = vmatprep.subr.mxu0 0.0
        %1666 = vmatpush1.msra.mxu0 0.0
        %1667 = vmatprep.mubr.f32.mxu0 0.0
        %1668 = vmatmul.mubr.f32.gmra.mrb[0].mxu0 %v1524
        %v1669 = vpop.f32.mrb[0].mxu0
        %v1670 = vadd.f32 0.0, %v1669
        %v1671 = vpop.f32.mrb[0].mxu0
        %1672 = vdwg.mxu0
        %v1673 = vadd.f32 %v1500, %v1599
        %v1674 = vadd.f32 %v1501, %v1601
        %v1675 = vadd.f32 %v1502, %v1670
        %s1676 = scalar_lea.vmem %s2, 64
        %v1677 = vld [vmem:[%s1676] sm:$0xff]
        %v1678 = vld [vmem:[#allocation2] sm:$0xff]
        %v1679 = vld [vmem:[#allocation2 + $0x8] sm:$0xff]
        %v1682 = vcombine.high %v1678, %v1678
        %v1683 = vcombine.high %v1679, %v1679
        %1684 = vrot.lane.b32.xlu0 %v1678, 90
        %v1685 = vpop.permute.xlu0 %1684
        %1686 = vrot.lane.b32.xlu0 %v1682, 90
        %v1687 = vpop.permute.xlu0 %1686
        %1688 = vrot.lane.b32.xlu0 %v1679, 90
        %v1689 = vpop.permute.xlu0 %1688
        %1690 = vrot.lane.b32.xlu0 %v1683, 90
        %v1691 = vpop.permute.xlu0 %1690
        %vm1692 = vcmask 736256
        %v1693 = vsel %vm1692, %v1685, %v1687
        %v1694 = vsel %vm1692, %v1687, %v1689
        %v1695 = vsel %vm1692, %v1689, %v1691
        %v1697 = vsel %vm310, %v1677, 0
        %v1699 = vsel %vm314, %v1693, 0
        %v1701 = vsel %vm314, %v1694, 0
        %v1703 = vsel %vm314, %v1695, 0
        %1705 = vmatprep.subr.mxu0 %v1701
        %1706 = vmatpush1.msra.mxu0 %v1699
        %1707 = vmatprep.subr.mxu0 0.0
        %1708 = vmatpush1.msra.mxu0 0.0
        %1709 = vmatprep.subr.mxu0 0.0
        %1710 = vmatpush1.msra.mxu0 0.0
        %1711 = vmatprep.subr.mxu0 0.0
        %1712 = vmatpush1.msra.mxu0 0.0
        %1713 = vmatprep.subr.mxu0 0.0
        %1714 = vmatpush1.msra.mxu0 0.0
        %1715 = vmatprep.subr.mxu0 0.0
        %1716 = vmatpush1.msra.mxu0 0.0
        %1717 = vmatprep.subr.mxu0 0.0
        %1718 = vmatpush1.msra.mxu0 0.0
        %1719 = vmatprep.subr.mxu0 0.0
        %1720 = vmatpush1.msra.mxu0 0.0
        %1721 = vmatprep.subr.mxu0 0.0
        %1722 = vmatpush1.msra.mxu0 0.0
        %1723 = vmatprep.subr.mxu0 0.0
        %1724 = vmatpush1.msra.mxu0 0.0
        %1725 = vmatprep.subr.mxu0 0.0
        %1726 = vmatpush1.msra.mxu0 0.0
        %1727 = vmatprep.subr.mxu0 0.0
        %1728 = vmatpush1.msra.mxu0 0.0
        %1729 = vmatprep.subr.mxu0 0.0
        %1730 = vmatpush1.msra.mxu0 0.0
        %1731 = vmatprep.subr.mxu0 0.0
        %1732 = vmatpush1.msra.mxu0 0.0
        %1733 = vmatprep.subr.mxu0 0.0
        %1734 = vmatpush1.msra.mxu0 0.0
        %1735 = vmatprep.subr.mxu0 0.0
        %1736 = vmatpush1.msra.mxu0 0.0
        %1737 = vmatprep.subr.mxu0 0.0
        %1738 = vmatpush1.msra.mxu0 0.0
        %1739 = vmatprep.subr.mxu0 0.0
        %1740 = vmatpush1.msra.mxu0 0.0
        %1741 = vmatprep.subr.mxu0 0.0
        %1742 = vmatpush1.msra.mxu0 0.0
        %1743 = vmatprep.subr.mxu0 0.0
        %1744 = vmatpush1.msra.mxu0 0.0
        %1745 = vmatprep.subr.mxu0 0.0
        %1746 = vmatpush1.msra.mxu0 0.0
        %1747 = vmatprep.subr.mxu0 0.0
        %1748 = vmatpush1.msra.mxu0 0.0
        %1749 = vmatprep.subr.mxu0 0.0
        %1750 = vmatpush1.msra.mxu0 0.0
        %1751 = vmatprep.subr.mxu0 0.0
        %1752 = vmatpush1.msra.mxu0 0.0
        %1753 = vmatprep.subr.mxu0 0.0
        %1754 = vmatpush1.msra.mxu0 0.0
        %1755 = vmatprep.subr.mxu0 0.0
        %1756 = vmatpush1.msra.mxu0 0.0
        %1757 = vmatprep.subr.mxu0 0.0
        %1758 = vmatpush1.msra.mxu0 0.0
        %1759 = vmatprep.subr.mxu0 0.0
        %1760 = vmatpush1.msra.mxu0 0.0
        %1761 = vmatprep.subr.mxu0 0.0
        %1762 = vmatpush1.msra.mxu0 0.0
        %1763 = vmatprep.subr.mxu0 0.0
        %1764 = vmatpush1.msra.mxu0 0.0
        %1765 = vmatprep.subr.mxu0 0.0
        %1766 = vmatpush1.msra.mxu0 0.0
        %1767 = vmatprep.subr.mxu0 0.0
        %1768 = vmatpush1.msra.mxu0 0.0
        %1769 = vmatprep.mubr.f32.mxu0 0.0
        %1770 = vmatmul.mubr.f32.gmra.mrb[0].mxu0 %v1697
        %v1771 = vpop.f32.mrb[0].mxu0
        %v1772 = vadd.f32 0.0, %v1771
        %v1773 = vpop.f32.mrb[0].mxu0
        %v1774 = vadd.f32 0.0, %v1773
        %1775 = vdwg.mxu0
        %1776 = vmatprep.subr.mxu0 0.0
        %1777 = vmatpush1.msra.mxu0 %v1703
        %1778 = vmatprep.subr.mxu0 0.0
        %1779 = vmatpush1.msra.mxu0 0.0
        %1780 = vmatprep.subr.mxu0 0.0
        %1781 = vmatpush1.msra.mxu0 0.0
        %1782 = vmatprep.subr.mxu0 0.0
        %1783 = vmatpush1.msra.mxu0 0.0
        %1784 = vmatprep.subr.mxu0 0.0
        %1785 = vmatpush1.msra.mxu0 0.0
        %1786 = vmatprep.subr.mxu0 0.0
        %1787 = vmatpush1.msra.mxu0 0.0
        %1788 = vmatprep.subr.mxu0 0.0
        %1789 = vmatpush1.msra.mxu0 0.0
        %1790 = vmatprep.subr.mxu0 0.0
        %1791 = vmatpush1.msra.mxu0 0.0
        %1792 = vmatprep.subr.mxu0 0.0
        %1793 = vmatpush1.msra.mxu0 0.0
        %1794 = vmatprep.subr.mxu0 0.0
        %1795 = vmatpush1.msra.mxu0 0.0
        %1796 = vmatprep.subr.mxu0 0.0
        %1797 = vmatpush1.msra.mxu0 0.0
        %1798 = vmatprep.subr.mxu0 0.0
        %1799 = vmatpush1.msra.mxu0 0.0
        %1800 = vmatprep.subr.mxu0 0.0
        %1801 = vmatpush1.msra.mxu0 0.0
        %1802 = vmatprep.subr.mxu0 0.0
        %1803 = vmatpush1.msra.mxu0 0.0
        %1804 = vmatprep.subr.mxu0 0.0
        %1805 = vmatpush1.msra.mxu0 0.0
        %1806 = vmatprep.subr.mxu0 0.0
        %1807 = vmatpush1.msra.mxu0 0.0
        %1808 = vmatprep.subr.mxu0 0.0
        %1809 = vmatpush1.msra.mxu0 0.0
        %1810 = vmatprep.subr.mxu0 0.0
        %1811 = vmatpush1.msra.mxu0 0.0
        %1812 = vmatprep.subr.mxu0 0.0
        %1813 = vmatpush1.msra.mxu0 0.0
        %1814 = vmatprep.subr.mxu0 0.0
        %1815 = vmatpush1.msra.mxu0 0.0
        %1816 = vmatprep.subr.mxu0 0.0
        %1817 = vmatpush1.msra.mxu0 0.0
        %1818 = vmatprep.subr.mxu0 0.0
        %1819 = vmatpush1.msra.mxu0 0.0
        %1820 = vmatprep.subr.mxu0 0.0
        %1821 = vmatpush1.msra.mxu0 0.0
        %1822 = vmatprep.subr.mxu0 0.0
        %1823 = vmatpush1.msra.mxu0 0.0
        %1824 = vmatprep.subr.mxu0 0.0
        %1825 = vmatpush1.msra.mxu0 0.0
        %1826 = vmatprep.subr.mxu0 0.0
        %1827 = vmatpush1.msra.mxu0 0.0
        %1828 = vmatprep.subr.mxu0 0.0
        %1829 = vmatpush1.msra.mxu0 0.0
        %1830 = vmatprep.subr.mxu0 0.0
        %1831 = vmatpush1.msra.mxu0 0.0
        %1832 = vmatprep.subr.mxu0 0.0
        %1833 = vmatpush1.msra.mxu0 0.0
        %1834 = vmatprep.subr.mxu0 0.0
        %1835 = vmatpush1.msra.mxu0 0.0
        %1836 = vmatprep.subr.mxu0 0.0
        %1837 = vmatpush1.msra.mxu0 0.0
        %1838 = vmatprep.subr.mxu0 0.0
        %1839 = vmatpush1.msra.mxu0 0.0
        %1840 = vmatprep.mubr.f32.mxu0 0.0
        %1841 = vmatmul.mubr.f32.gmra.mrb[0].mxu0 %v1697
        %v1842 = vpop.f32.mrb[0].mxu0
        %v1843 = vadd.f32 0.0, %v1842
        %v1844 = vpop.f32.mrb[0].mxu0
        %1845 = vdwg.mxu0
        %v1846 = vadd.f32 %v1673, %v1772
        %v1847 = vadd.f32 %v1674, %v1774
        %v1848 = vadd.f32 %v1675, %v1843
        %vm1849 = vcmp.ge.f32.partialorder %v1846, 0.0
        %vm1850 = vcmp.ge.f32.partialorder %v1847, 0.0
        %vm1851 = vcmp.ge.f32.partialorder %v1848, 0.0
        %v1852 = vmul.f32 %v1846, 0.1
        %v1853 = vmul.f32 %v1847, 0.1
        %v1854 = vmul.f32 %v1848, 0.1
        %v1855 = vsel %vm1849, %v1846, %v1852
        %v1856 = vsel %vm1850, %v1847, %v1853
        %v1857 = vsel %vm1851, %v1848, %v1854
        %1858 = vst [vmem:[%s260] sm:$0xff] %v1855
        %1859 = vst [vmem:[%s260 + $0x8] sm:$0xff] %v1856
        %1860 = vst [vmem:[%s260 + $0x10] sm:$0xff] %v1857
        %s1861 = sand.u32 %s142, 1
        %s1862 = scalar_lea.sflag [#allocation4], %s1861
        %s1863 = sand.u32 %s142, 1
        %s1864 = smul.addr %s1863, 24
        %s1865 = scalar_lea.vmem [#allocation3], %s1864
        // Predicated region
        $region37: #{tpu_custom_call.1} parent=35 // pred_check
          %p1866 = pneg %p152
        $region38: #{tpu_custom_call.1} parent=35 // pred_check_branch
          %1868 = sbr.rel (%p1866) target = $region40
        $region39: #{tpu_custom_call.1} parent=35 // pred_region
          %s1869 = smul.u32 3, %s23
          %s1871 = ssub.s32 384, 384
          %1872 = vsyncadd %s1862, %s1871
          %s1873 = smul.addr %s22, 3
          %s1874 = sadd.s32 %s1869, %s1873
          %s1875 = smul.addr %s1874, 128
          %s1876 = scalar_lea.hbm %s4, %s1875
          %s1878 = sshll.u32 %s1865, 4
          %s1879 = int_to_ptr.vmem [resolvable:$true] %s1878
          %1881 = dma.vmem_to_hbm [thread:$0]  %s1879, 384, %s1876, %s1862
        $region40: #{tpu_custom_call.1} parent=35 // pred_fallthru
          _
      $region36: #{tpu_custom_call.1} parent=5 // pred_fallthru
        _
      %p1882 = scmp.le.s32.totalorder 2, %s13
      // Predicated region
      $region41: #{tpu_custom_call.1} parent=5 // pred_check
        %p1883 = pneg %p1882
      $region42: #{tpu_custom_call.1} parent=5 // pred_check_branch
        %1885 = sbr.rel (%p1883) target = $region44
      $region43: #{tpu_custom_call.1} parent=5 // pred_region
        %s1886 = ssub.s32 %s13, 2
        // Predicated region
        $region45: #{tpu_custom_call.1} parent=43 // pred_check
          %p1887 = pneg %p158
        $region46: #{tpu_custom_call.1} parent=43 // pred_check_branch
          %1889 = sbr.rel (%p1887) target = $region48
        $region47: #{tpu_custom_call.1} parent=43 // pred_region
          %s1890 = sand.u32 %s143, 1
          %s1891 = scalar_lea.sflag [#allocation4], %s1890
          %s1892 = sand.u32 %s143, 1
          %s1893 = smul.addr %s1892, 24
          %s1894 = scalar_lea.vmem [#allocation3], %s1893
          %1895 = dma.done %s1891, 384
        $region48: #{tpu_custom_call.1} parent=43 // pred_fallthru
          _
      $region44: #{tpu_custom_call.1} parent=5 // pred_fallthru
        _
    $region6: #{tpu_custom_call.1} parent=1 // loop_footer
      %s17 = sadd.s32 1, %s13
    $region7: #{tpu_custom_call.1} parent=1 // loop_footer_branch
      %12 = sbr.rel target = $region3
    $region8: #{tpu_custom_call.1} parent=1 // loop_exit
      _
    %1896 = vsyncpa [#allocation4], 1
    %s1897 = scalar_lea.sflag [#allocation4], 1
    %1898 = vsyncpa %s1897, 1

</llo_original>
